<compile_context>
chip_gen: v6e
topology: v6e:2x2x1
jax: 0.10.0
libtpu: 0.0.40
codegen_flags: <defaults>
</compile_context>

<pallas_src>
import jax
import jax.numpy as jnp
from jax import lax
from jax.experimental import pallas as pl
from jax.experimental.pallas import tpu as pltpu


def _se_dec_block_kernel(x_ref, w1_ref, s1_ref, b1_ref, w2_ref, s2_ref, b2_ref,
                         wse1_ref, wse2_ref, o_ref, xpad_ref, ypad_ref):
    # Shapes (per grid step / batch block):
    #   x_ref    : (B, H, W*Cin)    bf16  lane-packed input rows (also the residual)
    #   w1_ref   : (K, W*Cin, W*C)  bf16  banded block-Toeplitz conv1 weights
    #   w2_ref   : (K, W*C,  W*C)   bf16  banded block-Toeplitz conv2 weights
    #   s*_ref   : (1, W*C)         f32   folded BatchNorm scale / bias, tiled over W
    #   wse1_ref : (W*C, Ch)        f32   SE squeeze weights, tiled over W, pre-scaled 1/(H*W)
    #   wse2_ref : (Ch, C)          f32   SE excite weights
    #   o_ref    : (B, H, W*C)      f32   lane-dense output rows
    #   xpad_ref : (B, H+2, W*Cin)  bf16  VMEM scratch (row-halo padded conv1 input)
    #   ypad_ref : (B, H+2, W*C)    bf16  VMEM scratch (row-halo padded conv2 input)
    B, H, WCin = x_ref.shape
    WC = o_ref.shape[2]
    K = w1_ref.shape[0]
    C = wse2_ref.shape[1]
    W = WC // C
    f32 = jnp.float32

    # Zero only the 1-row top/bottom halos (the width padding is folded into the band
    # weights and the interior rows are fully overwritten below).
    xpad_ref[:, 0:1, :] = jnp.zeros((B, 1, WCin), xpad_ref.dtype)
    xpad_ref[:, H + 1:H + 2, :] = jnp.zeros((B, 1, WCin), xpad_ref.dtype)
    ypad_ref[:, 0:1, :] = jnp.zeros((B, 1, WC), ypad_ref.dtype)
    ypad_ref[:, H + 1:H + 2, :] = jnp.zeros((B, 1, WC), ypad_ref.dtype)

    x = x_ref[...]                                       # (B, H, W*Cin) bf16
    xpad_ref[:, 1:H + 1, :] = x

    # ---- conv1: K banded matmuls (contraction depth W*Cin = 256) ----
    acc1 = jnp.zeros((B * H, WC), f32)
    for dy in range(K):                                  # static, unrolled
        rows = xpad_ref[:, dy:dy + H, :].reshape(B * H, WCin)
        acc1 += jnp.dot(rows, w1_ref[dy], preferred_element_type=f32)

    # bn1 (eval-mode folded) + relu6
    y1 = jnp.clip(acc1 * s1_ref[...] + b1_ref[...], 0.0, 6.0)        # (B*H, W*C) f32
    ypad_ref[:, 1:H + 1, :] = y1.reshape(B, H, WC).astype(ypad_ref.dtype)

    # ---- conv2 ----
    acc2 = jnp.zeros((B * H, WC), f32)
    for dy in range(K):
        rows = ypad_ref[:, dy:dy + H, :].reshape(B * H, WC)
        acc2 += jnp.dot(rows, w2_ref[dy], preferred_element_type=f32)

    # bn2 (eval-mode folded)
    y2 = (acc2 * s2_ref[...] + b2_ref[...]).reshape(B, H, WC)         # (B, H, W*C) f32

    # ---- squeeze-and-excitation (lane-resident row dots) ----
    zsum = jnp.sum(y2, axis=1)                                        # (B, W*C)
    h = jnp.clip(jnp.dot(zsum, wse1_ref[...], preferred_element_type=f32), 0.0, 6.0)  # (B, Ch)
    se = jax.nn.sigmoid(jnp.dot(h, wse2_ref[...], preferred_element_type=f32))        # (B, C)
    se_lane = jnp.tile(se, (1, W))                                    # (B, W*C)

    # ---- channel re-scaling, residual add, final relu6 ----
    out = y2 * se_lane[:, None, :] + x.astype(f32)
    o_ref[...] = jnp.clip(out, 0.0, 6.0).astype(o_ref.dtype)


def _banded_conv_weight(w_hwio, width):
    """(K, K, Cin, Cout) HWIO conv weights -> (K, width*Cin, width*Cout) banded
    block-Toeplitz matrices (one per vertical tap). Horizontal taps and 'SAME'
    width zero-padding are folded into the band structure."""
    K, _, Cin, Cout = w_hwio.shape
    bands = []
    for dy in range(K):
        acc = jnp.zeros((width, Cin, width, Cout), w_hwio.dtype)
        for dx in range(K):
            # output column w reads input column w + dx - (K-1)//2; out-of-image
            # columns are dropped (they correspond to zero padding).
            diag = jnp.eye(width, width, k=(K - 1) // 2 - dx, dtype=w_hwio.dtype)
            acc = acc + jnp.einsum('aw,io->aiwo', diag, w_hwio[dy, dx])
        bands.append(acc.reshape(width * Cin, width * Cout))
    return jnp.stack(bands)                                           # (K, W*Cin, W*Cout)


def se_resnet2d_basic_dec_block(x_nchw, params, block_batch=None):
    """Forward pass of SEResNet2dBasicDecBlock (stride=1, eval-mode BN).
    x_nchw: (N, Cin, H, W) float32 -> (N, C, H, W) float32."""
    w1, s1, b1 = params["w1"], params["s1"], params["b1"]
    w2, s2, b2 = params["w2"], params["s2"], params["b2"]
    wse1, wse2 = params["wse1"], params["wse2"]

    N, Cin, H, W = x_nchw.shape
    K = w1.shape[0]
    C = w1.shape[-1]
    Ch = wse1.shape[-1]
    assert Cin == C, "identity residual requires in_channels == channels (stride=1)"

    B_BLK = N if block_batch is None else block_batch
    assert N % B_BLK == 0

    # Lane-packed bf16 activations: (N, H, W*Cin) -- W and C share the 128-lane axis so
    # every block is a multiple of 128 lanes wide (lane-dense loads and stores).
    x_rows = jnp.transpose(x_nchw, (0, 2, 3, 1)).reshape(N, H, W * Cin).astype(jnp.bfloat16)

    band1 = _banded_conv_weight(w1, W).astype(jnp.bfloat16)           # (K, W*Cin, W*C)
    band2 = _banded_conv_weight(w2, W).astype(jnp.bfloat16)           # (K, W*C,  W*C)

    s1_l = jnp.tile(s1.astype(jnp.float32), (W,)).reshape(1, W * C)
    b1_l = jnp.tile(b1.astype(jnp.float32), (W,)).reshape(1, W * C)
    s2_l = jnp.tile(s2.astype(jnp.float32), (W,)).reshape(1, W * C)
    b2_l = jnp.tile(b2.astype(jnp.float32), (W,)).reshape(1, W * C)

    # Fold the global average pool into the SE squeeze weights (tiled over W, scaled 1/(H*W))
    # so the kernel-side SE is just two lane-resident dots.
    wse1_t = jnp.tile(wse1.astype(jnp.float32), (W, 1)) / float(H * W)    # (W*C, Ch)
    wse2_f = wse2.astype(jnp.float32)                                      # (Ch, C)

    const2d = lambda n: (0, 0)
    const3d = lambda n: (0, 0, 0)

    out_rows = pl.pallas_call(
        _se_dec_block_kernel,
        out_shape=jax.ShapeDtypeStruct((N, H, W * C), jnp.float32),
        grid=(N // B_BLK,),
        in_specs=[
            pl.BlockSpec((B_BLK, H, W * Cin), lambda n: (n, 0, 0)),
            pl.BlockSpec((K, W * Cin, W * C), const3d),
            pl.BlockSpec((1, W * C), const2d),
            pl.BlockSpec((1, W * C), const2d),
            pl.BlockSpec((K, W * C, W * C), const3d),
            pl.BlockSpec((1, W * C), const2d),
            pl.BlockSpec((1, W * C), const2d),
            pl.BlockSpec((W * C, Ch), const2d),
            pl.BlockSpec((Ch, C), const2d),
        ],
        out_specs=pl.BlockSpec((B_BLK, H, W * C), lambda n: (n, 0, 0)),
        scratch_shapes=[
            pltpu.VMEM((B_BLK, H + 2, W * Cin), jnp.bfloat16),
            pltpu.VMEM((B_BLK, H + 2, W * C), jnp.bfloat16),
        ],
        # VMEM use per step is ~2 MB at this size; default scoped limit is plenty.
        compiler_params=pltpu.CompilerParams(dimension_semantics=("parallel",)),
    )(x_rows, band1, s1_l, b1_l, band2, s2_l, b2_l, wse1_t, wse2_f)

    return jnp.transpose(out_rows.reshape(N, H, W, C), (0, 3, 1, 2))   # back to NCHW


# ----------------------------- parameter setup -----------------------------

def init_params(key, in_channels, channels, kernel_size=3, se_r=4):
    """Deterministic synthetic parameters; BatchNorm folded to per-channel (scale, bias)."""
    hid = max(channels // se_r, 1)
    ks = jax.random.split(key, 6)
    eps = 1e-5

    def bn_fold(k, c):
        kg, kb, km, kv = jax.random.split(k, 4)
        gamma = 1.0 + 0.1 * jax.random.normal(kg, (c,), jnp.float32)
        beta = 0.1 * jax.random.normal(kb, (c,), jnp.float32)
        mean = 0.1 * jax.random.normal(km, (c,), jnp.float32)
        var = jnp.abs(jax.random.normal(kv, (c,), jnp.float32)) + 0.5
        scale = gamma * lax.rsqrt(var + eps)
        bias = beta - mean * scale
        return scale, bias

    w1 = 0.1 * jax.random.normal(
        ks[0], (kernel_size, kernel_size, in_channels, channels), jnp.float32)
    w2 = 0.1 * jax.random.normal(
        ks[1], (kernel_size, kernel_size, channels, channels), jnp.float32)
    s1, b1 = bn_fold(ks[2], channels)
    s2, b2 = bn_fold(ks[3], channels)
    wse1 = 0.3 * jax.random.normal(ks[4], (channels, hid), jnp.float32)   # SE squeeze C -> Ch
    wse2 = 0.3 * jax.random.normal(ks[5], (hid, channels), jnp.float32)   # SE excite  Ch -> C
    return dict(w1=w1, s1=s1, b1=b1, w2=w2, s2=s2, b2=b2, wse1=wse1, wse2=wse2)


# ------------------------------ pure-JAX reference ------------------------------

def reference(x_nchw, p):
    """Pure-JAX reference with the same bf16-operand / f32-accumulate conv precision."""
    bf16, f32 = jnp.bfloat16, jnp.float32
    x = jnp.transpose(x_nchw, (0, 2, 3, 1)).astype(bf16)               # NHWC bf16

    def conv(a, w):
        return lax.conv_general_dilated(
            a.astype(bf16), w.astype(bf16), window_strides=(1, 1), padding="SAME",
            dimension_numbers=("NHWC", "HWIO", "NHWC"),
            preferred_element_type=f32)

    y = jnp.clip(conv(x, p["w1"]) * p["s1"] + p["b1"], 0.0, 6.0)       # f32
    y = conv(y, p["w2"]) * p["s2"] + p["b2"]
    z = jnp.mean(y, axis=(1, 2))                                       # (N, C)
    h = jnp.clip(z @ p["wse1"], 0.0, 6.0)                              # (N, Ch)
    s = jax.nn.sigmoid(h @ p["wse2"])                                  # (N, C)
    y = y * s[:, None, None, :]
    y = jnp.clip(y + x.astype(f32), 0.0, 6.0)
    return jnp.transpose(y, (0, 3, 1, 2))


if __name__ == "__main__":
    N, C, H, W = 2, 16, 16, 16        # in_channels == channels, stride=1 -> identity residual
    key = jax.random.PRNGKey(0)
    kx, kp = jax.random.split(key)
    x = jax.random.normal(kx, (N, C, H, W), jnp.float32)
    params = init_params(kp, C, C, kernel_size=3, se_r=4)

    out = jax.block_until_ready(se_resnet2d_basic_dec_block(x, params))
    ref = jax.block_until_ready(reference(x, params))

    assert out.shape == (N, C, H, W), out.shape
    max_err = float(jnp.max(jnp.abs(out - ref)))
    assert max_err < 1e-2, f"max abs error too large: {max_err}"
    print("KERNEL_OK")
</pallas_src>

<mosaic_0001>
module attributes {stable_mosaic.version = 11 : i64} {
  func.func @_se_dec_block_kernel(%arg0: i32, %arg1: memref<2x16x256xbf16, #tpu.memory_space<vmem>>, %arg2: memref<3x256x256xbf16, #tpu.memory_space<vmem>>, %arg3: memref<1x256xf32, #tpu.memory_space<vmem>>, %arg4: memref<1x256xf32, #tpu.memory_space<vmem>>, %arg5: memref<3x256x256xbf16, #tpu.memory_space<vmem>>, %arg6: memref<1x256xf32, #tpu.memory_space<vmem>>, %arg7: memref<1x256xf32, #tpu.memory_space<vmem>>, %arg8: memref<256x4xf32, #tpu.memory_space<vmem>>, %arg9: memref<4x16xf32, #tpu.memory_space<vmem>>, %arg10: memref<2x16x256xf32, #tpu.memory_space<vmem>>, %arg11: memref<2x18x256xbf16, #tpu.memory_space<vmem>>, %arg12: memref<2x18x256xbf16, #tpu.memory_space<vmem>>) attributes {dimension_semantics = [#tpu.dimension_semantics<parallel>], iteration_bounds = array<i64: 1>, scalar_prefetch = 0 : i64, scratch_operands = 2 : i64, tpu.core_type = #tpu.core_type<tc>, window_params = [{transform_indices = @transform_0, window_bounds = array<i64: 2, 16, 256>}, {pipeline_mode = #tpu.pipeline_mode<synchronous>, transform_indices = @transform_1, window_bounds = array<i64: 3, 256, 256>}, {pipeline_mode = #tpu.pipeline_mode<synchronous>, transform_indices = @transform_2, window_bounds = array<i64: 1, 256>}, {pipeline_mode = #tpu.pipeline_mode<synchronous>, transform_indices = @transform_3, window_bounds = array<i64: 1, 256>}, {pipeline_mode = #tpu.pipeline_mode<synchronous>, transform_indices = @transform_4, window_bounds = array<i64: 3, 256, 256>}, {pipeline_mode = #tpu.pipeline_mode<synchronous>, transform_indices = @transform_5, window_bounds = array<i64: 1, 256>}, {pipeline_mode = #tpu.pipeline_mode<synchronous>, transform_indices = @transform_6, window_bounds = array<i64: 1, 256>}, {pipeline_mode = #tpu.pipeline_mode<synchronous>, transform_indices = @transform_7, window_bounds = array<i64: 256, 4>}, {pipeline_mode = #tpu.pipeline_mode<synchronous>, transform_indices = @transform_8, window_bounds = array<i64: 4, 16>}, {transform_indices = @transform_9, window_bounds = array<i64: 2, 16, 256>}]} {
    %cst = arith.constant 0.000000e+00 : bf16
    %0 = vector.broadcast %cst : bf16 to vector<2x1x256xbf16>
    %c0 = arith.constant 0 : index
    %c0_0 = arith.constant 0 : index
    %c0_1 = arith.constant 0 : index
    %1 = vector.load %arg11[%c0, %c0_0, %c0_1] : memref<2x18x256xbf16, #tpu.memory_space<vmem>>, vector<2x1x256xbf16>
    tpu.vector_store %arg11[%c0, %c0_0, %c0_1], %0 {strides = array<i32>} : memref<2x18x256xbf16, #tpu.memory_space<vmem>>, vector<2x1x256xbf16>,
    %cst_2 = arith.constant 0.000000e+00 : bf16
    %2 = vector.broadcast %cst_2 : bf16 to vector<2x1x256xbf16>
    %c0_3 = arith.constant 0 : index
    %c17 = arith.constant 17 : index
    %c0_4 = arith.constant 0 : index
    %3 = vector.load %arg11[%c0_3, %c17, %c0_4] : memref<2x18x256xbf16, #tpu.memory_space<vmem>>, vector<2x1x256xbf16>
    tpu.vector_store %arg11[%c0_3, %c17, %c0_4], %2 {strides = array<i32>} : memref<2x18x256xbf16, #tpu.memory_space<vmem>>, vector<2x1x256xbf16>,
    %cst_5 = arith.constant 0.000000e+00 : bf16
    %4 = vector.broadcast %cst_5 : bf16 to vector<2x1x256xbf16>
    %c0_6 = arith.constant 0 : index
    %c0_7 = arith.constant 0 : index
    %c0_8 = arith.constant 0 : index
    %5 = vector.load %arg12[%c0_6, %c0_7, %c0_8] : memref<2x18x256xbf16, #tpu.memory_space<vmem>>, vector<2x1x256xbf16>
    tpu.vector_store %arg12[%c0_6, %c0_7, %c0_8], %4 {strides = array<i32>} : memref<2x18x256xbf16, #tpu.memory_space<vmem>>, vector<2x1x256xbf16>,
    %cst_9 = arith.constant 0.000000e+00 : bf16
    %6 = vector.broadcast %cst_9 : bf16 to vector<2x1x256xbf16>
    %c0_10 = arith.constant 0 : index
    %c17_11 = arith.constant 17 : index
    %c0_12 = arith.constant 0 : index
    %7 = vector.load %arg12[%c0_10, %c17_11, %c0_12] : memref<2x18x256xbf16, #tpu.memory_space<vmem>>, vector<2x1x256xbf16>
    tpu.vector_store %arg12[%c0_10, %c17_11, %c0_12], %6 {strides = array<i32>} : memref<2x18x256xbf16, #tpu.memory_space<vmem>>, vector<2x1x256xbf16>,
    %c0_13 = arith.constant 0 : index
    %c0_14 = arith.constant 0 : index
    %c0_15 = arith.constant 0 : index
    %8 = vector.load %arg1[%c0_13, %c0_14, %c0_15] : memref<2x16x256xbf16, #tpu.memory_space<vmem>>, vector<2x16x256xbf16>
    %c0_16 = arith.constant 0 : index
    %c1 = arith.constant 1 : index
    %c0_17 = arith.constant 0 : index
    %9 = vector.load %arg11[%c0_16, %c1, %c0_17] : memref<2x18x256xbf16, #tpu.memory_space<vmem>>, vector<2x16x256xbf16>
    tpu.vector_store %arg11[%c0_16, %c1, %c0_17], %8 {strides = array<i32>} : memref<2x18x256xbf16, #tpu.memory_space<vmem>>, vector<2x16x256xbf16>,
    %cst_18 = arith.constant 0.000000e+00 : f32
    %10 = vector.broadcast %cst_18 : f32 to vector<32x256xf32>
    %c0_19 = arith.constant 0 : index
    %c0_20 = arith.constant 0 : index
    %c0_21 = arith.constant 0 : index
    %11 = vector.load %arg11[%c0_19, %c0_20, %c0_21] : memref<2x18x256xbf16, #tpu.memory_space<vmem>>, vector<2x16x256xbf16>
    %12 = vector.shape_cast %11 : vector<2x16x256xbf16> to vector<32x256xbf16>
    %c0_22 = arith.constant 0 : index
    %c0_23 = arith.constant 0 : index
    %c0_24 = arith.constant 0 : index
    %13 = vector.load %arg2[%c0_22, %c0_23, %c0_24] : memref<3x256x256xbf16, #tpu.memory_space<vmem>>, vector<1x256x256xbf16>
    %14 = vector.shape_cast %13 : vector<1x256x256xbf16> to vector<256x256xbf16>
    %cst_25 = arith.constant dense<0.000000e+00> : vector<32x256xf32>
    %15 = tpu.matmul %12, %14, %cst_25 {dimension_numbers = #tpu.dot_dimension_numbers<[1], [0], [0], [1], [0, 0, 1, 1], [], []>} : vector<32x256xbf16>, vector<256x256xbf16>, vector<32x256xf32> -> vector<32x256xf32>
    %16 = arith.addf %10, %15 : vector<32x256xf32>
    %c0_26 = arith.constant 0 : index
    %c1_27 = arith.constant 1 : index
    %c0_28 = arith.constant 0 : index
    %17 = vector.load %arg11[%c0_26, %c1_27, %c0_28] : memref<2x18x256xbf16, #tpu.memory_space<vmem>>, vector<2x16x256xbf16>
    %18 = vector.shape_cast %17 : vector<2x16x256xbf16> to vector<32x256xbf16>
    %c1_29 = arith.constant 1 : index
    %c0_30 = arith.constant 0 : index
    %c0_31 = arith.constant 0 : index
    %19 = vector.load %arg2[%c1_29, %c0_30, %c0_31] : memref<3x256x256xbf16, #tpu.memory_space<vmem>>, vector<1x256x256xbf16>
    %20 = vector.shape_cast %19 : vector<1x256x256xbf16> to vector<256x256xbf16>
    %cst_32 = arith.constant dense<0.000000e+00> : vector<32x256xf32>
    %21 = tpu.matmul %18, %20, %cst_32 {dimension_numbers = #tpu.dot_dimension_numbers<[1], [0], [0], [1], [0, 0, 1, 1], [], []>} : vector<32x256xbf16>, vector<256x256xbf16>, vector<32x256xf32> -> vector<32x256xf32>
    %22 = arith.addf %16, %21 : vector<32x256xf32>
    %c0_33 = arith.constant 0 : index
    %c2 = arith.constant 2 : index
    %c0_34 = arith.constant 0 : index
    %23 = vector.load %arg11[%c0_33, %c2, %c0_34] : memref<2x18x256xbf16, #tpu.memory_space<vmem>>, vector<2x16x256xbf16>
    %24 = vector.shape_cast %23 : vector<2x16x256xbf16> to vector<32x256xbf16>
    %c2_35 = arith.constant 2 : index
    %c0_36 = arith.constant 0 : index
    %c0_37 = arith.constant 0 : index
    %25 = vector.load %arg2[%c2_35, %c0_36, %c0_37] : memref<3x256x256xbf16, #tpu.memory_space<vmem>>, vector<1x256x256xbf16>
    %26 = vector.shape_cast %25 : vector<1x256x256xbf16> to vector<256x256xbf16>
    %cst_38 = arith.constant dense<0.000000e+00> : vector<32x256xf32>
    %27 = tpu.matmul %24, %26, %cst_38 {dimension_numbers = #tpu.dot_dimension_numbers<[1], [0], [0], [1], [0, 0, 1, 1], [], []>} : vector<32x256xbf16>, vector<256x256xbf16>, vector<32x256xf32> -> vector<32x256xf32>
    %28 = arith.addf %22, %27 : vector<32x256xf32>
    %c0_39 = arith.constant 0 : index
    %c0_40 = arith.constant 0 : index
    %29 = vector.load %arg3[%c0_39, %c0_40] : memref<1x256xf32, #tpu.memory_space<vmem>>, vector<1x256xf32>
    %30 = vector.broadcast %29 : vector<1x256xf32> to vector<32x256xf32>
    %31 = arith.mulf %28, %30 : vector<32x256xf32>
    %c0_41 = arith.constant 0 : index
    %c0_42 = arith.constant 0 : index
    %32 = vector.load %arg4[%c0_41, %c0_42] : memref<1x256xf32, #tpu.memory_space<vmem>>, vector<1x256xf32>
    %33 = vector.broadcast %32 : vector<1x256xf32> to vector<32x256xf32>
    %34 = arith.addf %31, %33 : vector<32x256xf32>
    %cst_43 = arith.constant 0.000000e+00 : f32
    %cst_44 = arith.constant 6.000000e+00 : f32
    %35 = vector.broadcast %cst_43 : f32 to vector<32x256xf32>
    %36 = arith.maximumf %35, %34 : vector<32x256xf32>
    %37 = vector.broadcast %cst_44 : f32 to vector<32x256xf32>
    %38 = arith.minimumf %37, %36 : vector<32x256xf32>
    %39 = vector.shape_cast %38 : vector<32x256xf32> to vector<2x16x256xf32>
    %40 = arith.truncf %39 : vector<2x16x256xf32> to vector<2x16x256xbf16>
    %c0_45 = arith.constant 0 : index
    %c1_46 = arith.constant 1 : index
    %c0_47 = arith.constant 0 : index
    %41 = vector.load %arg12[%c0_45, %c1_46, %c0_47] : memref<2x18x256xbf16, #tpu.memory_space<vmem>>, vector<2x16x256xbf16>
    tpu.vector_store %arg12[%c0_45, %c1_46, %c0_47], %40 {strides = array<i32>} : memref<2x18x256xbf16, #tpu.memory_space<vmem>>, vector<2x16x256xbf16>,
    %cst_48 = arith.constant 0.000000e+00 : f32
    %42 = vector.broadcast %cst_48 : f32 to vector<32x256xf32>
    %c0_49 = arith.constant 0 : index
    %c0_50 = arith.constant 0 : index
    %c0_51 = arith.constant 0 : index
    %43 = vector.load %arg12[%c0_49, %c0_50, %c0_51] : memref<2x18x256xbf16, #tpu.memory_space<vmem>>, vector<2x16x256xbf16>
    %44 = vector.shape_cast %43 : vector<2x16x256xbf16> to vector<32x256xbf16>
    %c0_52 = arith.constant 0 : index
    %c0_53 = arith.constant 0 : index
    %c0_54 = arith.constant 0 : index
    %45 = vector.load %arg5[%c0_52, %c0_53, %c0_54] : memref<3x256x256xbf16, #tpu.memory_space<vmem>>, vector<1x256x256xbf16>
    %46 = vector.shape_cast %45 : vector<1x256x256xbf16> to vector<256x256xbf16>
    %cst_55 = arith.constant dense<0.000000e+00> : vector<32x256xf32>
    %47 = tpu.matmul %44, %46, %cst_55 {dimension_numbers = #tpu.dot_dimension_numbers<[1], [0], [0], [1], [0, 0, 1, 1], [], []>} : vector<32x256xbf16>, vector<256x256xbf16>, vector<32x256xf32> -> vector<32x256xf32>
    %48 = arith.addf %42, %47 : vector<32x256xf32>
    %c0_56 = arith.constant 0 : index
    %c1_57 = arith.constant 1 : index
    %c0_58 = arith.constant 0 : index
    %49 = vector.load %arg12[%c0_56, %c1_57, %c0_58] : memref<2x18x256xbf16, #tpu.memory_space<vmem>>, vector<2x16x256xbf16>
    %50 = vector.shape_cast %49 : vector<2x16x256xbf16> to vector<32x256xbf16>
    %c1_59 = arith.constant 1 : index
    %c0_60 = arith.constant 0 : index
    %c0_61 = arith.constant 0 : index
    %51 = vector.load %arg5[%c1_59, %c0_60, %c0_61] : memref<3x256x256xbf16, #tpu.memory_space<vmem>>, vector<1x256x256xbf16>
    %52 = vector.shape_cast %51 : vector<1x256x256xbf16> to vector<256x256xbf16>
    %cst_62 = arith.constant dense<0.000000e+00> : vector<32x256xf32>
    %53 = tpu.matmul %50, %52, %cst_62 {dimension_numbers = #tpu.dot_dimension_numbers<[1], [0], [0], [1], [0, 0, 1, 1], [], []>} : vector<32x256xbf16>, vector<256x256xbf16>, vector<32x256xf32> -> vector<32x256xf32>
    %54 = arith.addf %48, %53 : vector<32x256xf32>
    %c0_63 = arith.constant 0 : index
    %c2_64 = arith.constant 2 : index
    %c0_65 = arith.constant 0 : index
    %55 = vector.load %arg12[%c0_63, %c2_64, %c0_65] : memref<2x18x256xbf16, #tpu.memory_space<vmem>>, vector<2x16x256xbf16>
    %56 = vector.shape_cast %55 : vector<2x16x256xbf16> to vector<32x256xbf16>
    %c2_66 = arith.constant 2 : index
    %c0_67 = arith.constant 0 : index
    %c0_68 = arith.constant 0 : index
    %57 = vector.load %arg5[%c2_66, %c0_67, %c0_68] : memref<3x256x256xbf16, #tpu.memory_space<vmem>>, vector<1x256x256xbf16>
    %58 = vector.shape_cast %57 : vector<1x256x256xbf16> to vector<256x256xbf16>
    %cst_69 = arith.constant dense<0.000000e+00> : vector<32x256xf32>
    %59 = tpu.matmul %56, %58, %cst_69 {dimension_numbers = #tpu.dot_dimension_numbers<[1], [0], [0], [1], [0, 0, 1, 1], [], []>} : vector<32x256xbf16>, vector<256x256xbf16>, vector<32x256xf32> -> vector<32x256xf32>
    %60 = arith.addf %54, %59 : vector<32x256xf32>
    %c0_70 = arith.constant 0 : index
    %c0_71 = arith.constant 0 : index
    %61 = vector.load %arg6[%c0_70, %c0_71] : memref<1x256xf32, #tpu.memory_space<vmem>>, vector<1x256xf32>
    %62 = vector.broadcast %61 : vector<1x256xf32> to vector<32x256xf32>
    %63 = arith.mulf %60, %62 : vector<32x256xf32>
    %c0_72 = arith.constant 0 : index
    %c0_73 = arith.constant 0 : index
    %64 = vector.load %arg7[%c0_72, %c0_73] : memref<1x256xf32, #tpu.memory_space<vmem>>, vector<1x256xf32>
    %65 = vector.broadcast %64 : vector<1x256xf32> to vector<32x256xf32>
    %66 = arith.addf %63, %65 : vector<32x256xf32>
    %67 = vector.shape_cast %66 : vector<32x256xf32> to vector<2x16x256xf32>
    %cst_74 = arith.constant dense<0.000000e+00> : vector<2x256xf32>
    %68 = vector.multi_reduction <add>, %67, %cst_74 [1] : vector<2x16x256xf32> to vector<2x256xf32>
    %c0_75 = arith.constant 0 : index
    %c0_76 = arith.constant 0 : index
    %69 = vector.load %arg8[%c0_75, %c0_76] : memref<256x4xf32, #tpu.memory_space<vmem>>, vector<256x4xf32>
    %cst_77 = arith.constant dense<0.000000e+00> : vector<2x4xf32>
    %70 = tpu.matmul %68, %69, %cst_77 {dimension_numbers = #tpu.dot_dimension_numbers<[1], [0], [0], [1], [0, 0, 1, 1], [], []>} : vector<2x256xf32>, vector<256x4xf32>, vector<2x4xf32> -> vector<2x4xf32>
    %cst_78 = arith.constant 0.000000e+00 : f32
    %cst_79 = arith.constant 6.000000e+00 : f32
    %71 = vector.broadcast %cst_78 : f32 to vector<2x4xf32>
    %72 = arith.maximumf %71, %70 : vector<2x4xf32>
    %73 = vector.broadcast %cst_79 : f32 to vector<2x4xf32>
    %74 = arith.minimumf %73, %72 : vector<2x4xf32>
    %c0_80 = arith.constant 0 : index
    %c0_81 = arith.constant 0 : index
    %75 = vector.load %arg9[%c0_80, %c0_81] : memref<4x16xf32, #tpu.memory_space<vmem>>, vector<4x16xf32>
    %cst_82 = arith.constant dense<0.000000e+00> : vector<2x16xf32>
    %76 = tpu.matmul %74, %75, %cst_82 {dimension_numbers = #tpu.dot_dimension_numbers<[1], [0], [0], [1], [0, 0, 1, 1], [], []>} : vector<2x4xf32>, vector<4x16xf32>, vector<2x16xf32> -> vector<2x16xf32>
    %77 = arith.negf %76 : vector<2x16xf32>
    %78 = math.exp %77 : vector<2x16xf32>
    %cst_83 = arith.constant 1.000000e+00 : f32
    %79 = vector.broadcast %cst_83 : f32 to vector<2x16xf32>
    %80 = arith.addf %79, %78 : vector<2x16xf32>
    %81 = arith.divf %79, %80 : vector<2x16xf32>
    %82 = tpu.concatenate %81, %81, %81, %81, %81, %81, %81, %81, %81, %81, %81, %81, %81, %81, %81, %81 in 1 : vector<2x16xf32>, vector<2x16xf32>, vector<2x16xf32>, vector<2x16xf32>, vector<2x16xf32>, vector<2x16xf32>, vector<2x16xf32>, vector<2x16xf32>, vector<2x16xf32>, vector<2x16xf32>, vector<2x16xf32>, vector<2x16xf32>, vector<2x16xf32>, vector<2x16xf32>, vector<2x16xf32>, vector<2x16xf32> -> vector<2x256xf32>
    %83 = vector.shape_cast %82 : vector<2x256xf32> to vector<2x1x256xf32>
    %84 = vector.broadcast %83 : vector<2x1x256xf32> to vector<2x16x256xf32>
    %85 = arith.mulf %67, %84 : vector<2x16x256xf32>
    %86 = arith.extf %8 : vector<2x16x256xbf16> to vector<2x16x256xf32>
    %87 = arith.addf %85, %86 : vector<2x16x256xf32>
    %cst_84 = arith.constant 0.000000e+00 : f32
    %cst_85 = arith.constant 6.000000e+00 : f32
    %88 = vector.broadcast %cst_84 : f32 to vector<2x16x256xf32>
    %89 = arith.maximumf %88, %87 : vector<2x16x256xf32>
    %90 = vector.broadcast %cst_85 : f32 to vector<2x16x256xf32>
    %91 = arith.minimumf %90, %89 : vector<2x16x256xf32>
    %c0_86 = arith.constant 0 : index
    %c0_87 = arith.constant 0 : index
    %c0_88 = arith.constant 0 : index
    %92 = vector.load %arg10[%c0_86, %c0_87, %c0_88] : memref<2x16x256xf32, #tpu.memory_space<vmem>>, vector<2x16x256xf32>
    tpu.vector_store %arg10[%c0_86, %c0_87, %c0_88], %91 {strides = array<i32>} : memref<2x16x256xf32, #tpu.memory_space<vmem>>, vector<2x16x256xf32>,
    return
  }
  func.func @transform_0(%arg0: i32) -> (i32, i32, i32) {
    %c0_i32 = arith.constant 0 : i32
    %c0_i32_0 = arith.constant 0 : i32
    %c0_i32_1 = arith.constant 0 : i32
    return %arg0, %c0_i32, %c0_i32_0 : i32, i32, i32
  }
  func.func @transform_1(%arg0: i32) -> (i32, i32, i32) {
    %c0_i32 = arith.constant 0 : i32
    %c0_i32_0 = arith.constant 0 : i32
    %c0_i32_1 = arith.constant 0 : i32
    %c0_i32_2 = arith.constant 0 : i32
    return %c0_i32, %c0_i32_0, %c0_i32_1 : i32, i32, i32
  }
  func.func @transform_2(%arg0: i32) -> (i32, i32) {
    %c0_i32 = arith.constant 0 : i32
    %c0_i32_0 = arith.constant 0 : i32
    %c0_i32_1 = arith.constant 0 : i32
    return %c0_i32, %c0_i32_0 : i32, i32
  }
  func.func @transform_3(%arg0: i32) -> (i32, i32) {
    %c0_i32 = arith.constant 0 : i32
    %c0_i32_0 = arith.constant 0 : i32
    %c0_i32_1 = arith.constant 0 : i32
    return %c0_i32, %c0_i32_0 : i32, i32
  }
  func.func @transform_4(%arg0: i32) -> (i32, i32, i32) {
    %c0_i32 = arith.constant 0 : i32
    %c0_i32_0 = arith.constant 0 : i32
    %c0_i32_1 = arith.constant 0 : i32
    %c0_i32_2 = arith.constant 0 : i32
    return %c0_i32, %c0_i32_0, %c0_i32_1 : i32, i32, i32
  }
  func.func @transform_5(%arg0: i32) -> (i32, i32) {
    %c0_i32 = arith.constant 0 : i32
    %c0_i32_0 = arith.constant 0 : i32
    %c0_i32_1 = arith.constant 0 : i32
    return %c0_i32, %c0_i32_0 : i32, i32
  }
  func.func @transform_6(%arg0: i32) -> (i32, i32) {
    %c0_i32 = arith.constant 0 : i32
    %c0_i32_0 = arith.constant 0 : i32
    %c0_i32_1 = arith.constant 0 : i32
    return %c0_i32, %c0_i32_0 : i32, i32
  }
  func.func @transform_7(%arg0: i32) -> (i32, i32) {
    %c0_i32 = arith.constant 0 : i32
    %c0_i32_0 = arith.constant 0 : i32
    %c0_i32_1 = arith.constant 0 : i32
    return %c0_i32, %c0_i32_0 : i32, i32
  }
  func.func @transform_8(%arg0: i32) -> (i32, i32) {
    %c0_i32 = arith.constant 0 : i32
    %c0_i32_0 = arith.constant 0 : i32
    %c0_i32_1 = arith.constant 0 : i32
    return %c0_i32, %c0_i32_0 : i32, i32
  }
  func.func @transform_9(%arg0: i32) -> (i32, i32, i32) {
    %c0_i32 = arith.constant 0 : i32
    %c0_i32_0 = arith.constant 0 : i32
    %c0_i32_1 = arith.constant 0 : i32
    return %arg0, %c0_i32, %c0_i32_0 : i32, i32, i32
  }
}

</mosaic_0001>

<llo_original>
// kernel: tpu_custom_call.1
$region0: #{tpu_custom_call.1}
  #allocation0 [shape = 'u32[]', space=smem, size = 0x4, offset = 0x4, fixed_abs, tag = 'smem constant byte address 0x4 - core index']
  #allocation1 [shape = 'u32[144,128]{1,0:T(1,128)}', space=vmem, size = 0x12000, scoped, tag = 'internal scratch']
  #allocation2 [shape = 'bf16[2,18,256]{2,1,0:T(8,128)(2,1)}', space=vmem, size = 0x6000, scoped, tag = 'scratch operand']
  #allocation3 [shape = 'bf16[2,18,256]{2,1,0:T(8,128)(2,1)}', space=vmem, size = 0x6000, scoped, tag = 'scratch operand']
  %s0 = inlined_call_operand.vmem [shape: bf16[2,16,256], index: 0, kind: input, shape index: {}]
  %s1 = inlined_call_operand.hbm [shape: bf16[3,256,256], index: 1, kind: input, shape index: {}]
  %s2 = inlined_call_operand.vmem [shape: f32[1,256], index: 2, kind: input, shape index: {}]
  %s3 = inlined_call_operand.vmem [shape: f32[1,256], index: 3, kind: input, shape index: {}]
  %s4 = inlined_call_operand.hbm [shape: bf16[3,256,256], index: 4, kind: input, shape index: {}]
  %s5 = inlined_call_operand.vmem [shape: f32[1,256], index: 5, kind: input, shape index: {}]
  %s6 = inlined_call_operand.vmem [shape: f32[1,256], index: 6, kind: input, shape index: {}]
  %s7 = inlined_call_operand.vmem [shape: f32[256,4], index: 7, kind: input, shape index: {}]
  %s8 = inlined_call_operand.vmem [shape: f32[4,16], index: 8, kind: input, shape index: {}]
  %s9 = inlined_call_operand.hbm [shape: f32[2,16,256], index: 9, kind: output, shape index: {}]
  %s10 = sld [smem:[#allocation0]]
  $region54: #{tpu_custom_call.1} parent=0
    _
  %s12 = ssub.s32 1, %s10
  %s13 = scalar_select 0, %s12, %s10
  $region1: #{tpu_custom_call.1} parent=0
    #allocation4 [shape = 'u8[393216]{0}', space=vmem, size = 0x60000, scoped, tag = 'input window, operand 1, single buffered']
    #allocation5 [shape = 's32[1]{0}', space=sflag, size = 0x4, scoped, tag = 'scoped memory for tpu_custom_call.1']
    #allocation6 [shape = 's32[1]{0}', space=sflag, size = 0x4, scoped, tag = 'scoped memory for tpu_custom_call.1']
    #allocation7 [shape = 'u8[393216]{0}', space=vmem, size = 0x60000, scoped, tag = 'input window, operand 4, single buffered']
    #allocation8 [shape = 's32[1]{0}', space=sflag, size = 0x4, scoped, tag = 'scoped memory for tpu_custom_call.1']
    #allocation9 [shape = 'u8[32768]{0}', space=vmem, size = 0x8000, scoped, tag = 'output window, operand 0, single buffered']
    %14 = vsyncpa [#allocation5], 0
    %15 = vsyncpa [#allocation8], 0
    %16 = vsyncpa [#allocation6], 0
    // Predicated region
    $region2: #{tpu_custom_call.1} parent=1 // pred_check
      _
    $region3: #{tpu_custom_call.1} parent=1 // pred_check_branch
      %18 = sbr.rel (0) target = $region5
    $region4: #{tpu_custom_call.1} parent=1 // pred_region
      _
    $region5: #{tpu_custom_call.1} parent=1 // pred_fallthru
      _
    // Predicated region
    $region6: #{tpu_custom_call.1} parent=1 // pred_check
      _
    $region7: #{tpu_custom_call.1} parent=1 // pred_check_branch
      %20 = sbr.rel (0) target = $region9
    $region8: #{tpu_custom_call.1} parent=1 // pred_region
      %s22 = ssub.s32 12288, 12288
      %23 = vsyncadd [#allocation5], %s22
      %s24 = sshll.u32 [#allocation4], 4
      %s25 = int_to_ptr.vmem [resolvable:$true] %s24
      %30 = dma.hbm_to_vmem [thread:$0]  %s1, 12288, %s25, [#allocation5], 128, 128, 8
    $region9: #{tpu_custom_call.1} parent=1 // pred_fallthru
      _
    // Predicated region
    $region10: #{tpu_custom_call.1} parent=1 // pred_check
      _
    $region11: #{tpu_custom_call.1} parent=1 // pred_check_branch
      %32 = sbr.rel (0) target = $region13
    $region12: #{tpu_custom_call.1} parent=1 // pred_region
      _
    $region13: #{tpu_custom_call.1} parent=1 // pred_fallthru
      _
    // Predicated region
    $region14: #{tpu_custom_call.1} parent=1 // pred_check
      _
    $region15: #{tpu_custom_call.1} parent=1 // pred_check_branch
      %34 = sbr.rel (0) target = $region17
    $region16: #{tpu_custom_call.1} parent=1 // pred_region
      _
    $region17: #{tpu_custom_call.1} parent=1 // pred_fallthru
      _
    // Predicated region
    $region18: #{tpu_custom_call.1} parent=1 // pred_check
      _
    $region19: #{tpu_custom_call.1} parent=1 // pred_check_branch
      %36 = sbr.rel (0) target = $region21
    $region20: #{tpu_custom_call.1} parent=1 // pred_region
      %s38 = ssub.s32 12288, 12288
      %39 = vsyncadd [#allocation8], %s38
      %s40 = sshll.u32 [#allocation7], 4
      %s41 = int_to_ptr.vmem [resolvable:$true] %s40
      %46 = dma.hbm_to_vmem [thread:$0]  %s4, 12288, %s41, [#allocation8], 128, 128, 8
    $region21: #{tpu_custom_call.1} parent=1 // pred_fallthru
      _
    // Predicated region
    $region22: #{tpu_custom_call.1} parent=1 // pred_check
      _
    $region23: #{tpu_custom_call.1} parent=1 // pred_check_branch
      %48 = sbr.rel (0) target = $region25
    $region24: #{tpu_custom_call.1} parent=1 // pred_region
      _
    $region25: #{tpu_custom_call.1} parent=1 // pred_fallthru
      _
    // Predicated region
    $region26: #{tpu_custom_call.1} parent=1 // pred_check
      _
    $region27: #{tpu_custom_call.1} parent=1 // pred_check_branch
      %50 = sbr.rel (0) target = $region29
    $region28: #{tpu_custom_call.1} parent=1 // pred_region
      _
    $region29: #{tpu_custom_call.1} parent=1 // pred_fallthru
      _
    // Predicated region
    $region30: #{tpu_custom_call.1} parent=1 // pred_check
      _
    $region31: #{tpu_custom_call.1} parent=1 // pred_check_branch
      %52 = sbr.rel (0) target = $region33
    $region32: #{tpu_custom_call.1} parent=1 // pred_region
      _
    $region33: #{tpu_custom_call.1} parent=1 // pred_fallthru
      _
    // Predicated region
    $region34: #{tpu_custom_call.1} parent=1 // pred_check
      _
    $region35: #{tpu_custom_call.1} parent=1 // pred_check_branch
      %54 = sbr.rel (0) target = $region37
    $region36: #{tpu_custom_call.1} parent=1 // pred_region
      _
    $region37: #{tpu_custom_call.1} parent=1 // pred_fallthru
      _
    // Predicated region
    $region38: #{tpu_custom_call.1} parent=1 // pred_check
      _
    $region39: #{tpu_custom_call.1} parent=1 // pred_check_branch
      %56 = sbr.rel (0) target = $region41
    $region40: #{tpu_custom_call.1} parent=1 // pred_region
      %57 = dma.done [#allocation5], 12288
    $region41: #{tpu_custom_call.1} parent=1 // pred_fallthru
      _
    // Predicated region
    $region42: #{tpu_custom_call.1} parent=1 // pred_check
      _
    $region43: #{tpu_custom_call.1} parent=1 // pred_check_branch
      %59 = sbr.rel (0) target = $region45
    $region44: #{tpu_custom_call.1} parent=1 // pred_region
      %60 = dma.done [#allocation8], 12288
    $region45: #{tpu_custom_call.1} parent=1 // pred_fallthru
      _
    %vm62 = vcmask 1040384
    %vm63 = vsmask.f32 256
    %vm64 = vmand %vm62, %vm63
    %vm65 = vcmask 1044484
    %vm66 = vsmask.f32 4352
    %vm67 = vmand %vm65, %vm66
    %vm68 = vmor %vm67, %vm64
    %v69 = vld [vmem:[#allocation2] sm:$0x11]
    %v70 = vsel %vm68, 0, %v69
    %71 = vst [vmem:[#allocation2] sm:$0x11] %v70
    %v72 = vld [vmem:[#allocation2 + $0x18] sm:$0x11]
    %v73 = vsel %vm68, 0, %v72
    %74 = vst [vmem:[#allocation2 + $0x18] sm:$0x11] %v73
    %vm75 = vsmask.f32 7938
    %vm76 = vmand %vm62, %vm75
    %vm77 = vsmask.f32 7954
    %vm78 = vmand %vm65, %vm77
    %vm79 = vmor %vm78, %vm76
    %v80 = vld [vmem:[#allocation2 + $0x10] sm:$0x11]
    %v81 = vsel %vm79, 0, %v80
    %82 = vst [vmem:[#allocation2 + $0x10] sm:$0x11] %v81
    %v83 = vld [vmem:[#allocation2 + $0x28] sm:$0x11]
    %v84 = vsel %vm79, 0, %v83
    %85 = vst [vmem:[#allocation2 + $0x28] sm:$0x11] %v84
    %v86 = vld [vmem:[#allocation3] sm:$0x11]
    %v87 = vsel %vm68, 0, %v86
    %88 = vst [vmem:[#allocation3] sm:$0x11] %v87
    %v89 = vld [vmem:[#allocation3 + $0x18] sm:$0x11]
    %v90 = vsel %vm68, 0, %v89
    %91 = vst [vmem:[#allocation3 + $0x18] sm:$0x11] %v90
    %v92 = vld [vmem:[#allocation3 + $0x10] sm:$0x11]
    %v93 = vsel %vm79, 0, %v92
    %94 = vst [vmem:[#allocation3 + $0x10] sm:$0x11] %v93
    %v95 = vld [vmem:[#allocation3 + $0x28] sm:$0x11]
    %v96 = vsel %vm79, 0, %v95
    %97 = vst [vmem:[#allocation3 + $0x28] sm:$0x11] %v96
    %v98 = vld [vmem:[%s0] sm:$0xff]
    %v99 = vld [vmem:[%s0 + $0x8] sm:$0xff]
    %v100 = vld [vmem:[%s0 + $0x10] sm:$0xff]
    %v101 = vld [vmem:[%s0 + $0x18] sm:$0xff]
    %vm102 = vsmask.f32 4368
    %vm103 = vmor %vm63, %vm102
    %v105 = vshrl.u32 %v98, 16
    %v107 = vrot.slane %v105, 7
    %v108 = vshll.u32 %v98, 16
    %v110 = vor.u32 %v107, %v108
    %v111 = vrot.slane %v107, 4
    %v113 = vshrl.u32 %v99, 16
    %v115 = vrot.slane %v113, 7
    %v116 = vshll.u32 %v99, 16
    %v118 = vor.u32 %v115, %v116
    %v119 = vsel %vm103, %v111, %v118
    %v120 = vrot.slane %v115, 4
    %v122 = vshrl.u32 %v100, 16
    %v124 = vrot.slane %v122, 7
    %v125 = vshll.u32 %v100, 16
    %v127 = vor.u32 %v124, %v125
    %v128 = vrot.slane %v124, 4
    %v130 = vshrl.u32 %v101, 16
    %v132 = vrot.slane %v130, 7
    %v133 = vshll.u32 %v101, 16
    %v135 = vor.u32 %v132, %v133
    %v136 = vsel %vm103, %v128, %v135
    %v137 = vrot.slane %v132, 4
    %vm144 = vcmask 1043456
    %vm145 = vmand %vm144, %vm75
    %vm146 = vcmask 1047556
    %vm147 = vmand %vm146, %vm77
    %vm148 = vmor %vm147, %vm145
    %v149 = vld [vmem:[#allocation2] sm:$0xff]
    %v150 = vsel %vm148, %v110, %v149
    %151 = vst [vmem:[#allocation2] sm:$0xff] %v150
    %152 = vst [vmem:[#allocation2 + $0x8] sm:$0xff] %v119
    %v153 = vld [vmem:[#allocation2 + $0x10] sm:$0x11]
    %v154 = vsel %vm68, %v120, %v153
    %155 = vst [vmem:[#allocation2 + $0x10] sm:$0x11] %v154
    %v156 = vld [vmem:[#allocation2 + $0x18] sm:$0xff]
    %v157 = vsel %vm148, %v127, %v156
    %158 = vst [vmem:[#allocation2 + $0x18] sm:$0xff] %v157
    %159 = vst [vmem:[#allocation2 + $0x20] sm:$0xff] %v136
    %v160 = vld [vmem:[#allocation2 + $0x28] sm:$0x11]
    %v161 = vsel %vm68, %v137, %v160
    %162 = vst [vmem:[#allocation2 + $0x28] sm:$0x11] %v161
    %v163 = vld [vmem:[#allocation2] sm:$0xff]
    %v164 = vld [vmem:[#allocation2 + $0x8] sm:$0xff]
    %v165 = vld [vmem:[#allocation2 + $0x18] sm:$0xff]
    %v166 = vld [vmem:[#allocation2 + $0x20] sm:$0xff]
    %v167 = vld [vmem:[#allocation4] sm:$0xff]
    %v168 = vld [vmem:[#allocation4 + $0x8] sm:$0xff]
    %v169 = vld [vmem:[#allocation4 + $0x10] sm:$0xff]
    %v170 = vld [vmem:[#allocation4 + $0x18] sm:$0xff]
    %v171 = vld [vmem:[#allocation4 + $0x20] sm:$0xff]
    %v172 = vld [vmem:[#allocation4 + $0x28] sm:$0xff]
    %v173 = vld [vmem:[#allocation4 + $0x30] sm:$0xff]
    %v174 = vld [vmem:[#allocation4 + $0x38] sm:$0xff]
    %v175 = vld [vmem:[#allocation4 + $0x40] sm:$0xff]
    %v176 = vld [vmem:[#allocation4 + $0x48] sm:$0xff]
    %v177 = vld [vmem:[#allocation4 + $0x50] sm:$0xff]
    %v178 = vld [vmem:[#allocation4 + $0x58] sm:$0xff]
    %v179 = vld [vmem:[#allocation4 + $0x60] sm:$0xff]
    %v180 = vld [vmem:[#allocation4 + $0x68] sm:$0xff]
    %v181 = vld [vmem:[#allocation4 + $0x70] sm:$0xff]
    %v182 = vld [vmem:[#allocation4 + $0x78] sm:$0xff]
    %v183 = vld [vmem:[#allocation4 + $0x80] sm:$0xff]
    %v184 = vld [vmem:[#allocation4 + $0x88] sm:$0xff]
    %v185 = vld [vmem:[#allocation4 + $0x90] sm:$0xff]
    %v186 = vld [vmem:[#allocation4 + $0x98] sm:$0xff]
    %v187 = vld [vmem:[#allocation4 + $0xa0] sm:$0xff]
    %v188 = vld [vmem:[#allocation4 + $0xa8] sm:$0xff]
    %v189 = vld [vmem:[#allocation4 + $0xb0] sm:$0xff]
    %v190 = vld [vmem:[#allocation4 + $0xb8] sm:$0xff]
    %v191 = vld [vmem:[#allocation4 + $0xc0] sm:$0xff]
    %v192 = vld [vmem:[#allocation4 + $0xc8] sm:$0xff]
    %v193 = vld [vmem:[#allocation4 + $0xd0] sm:$0xff]
    %v194 = vld [vmem:[#allocation4 + $0xd8] sm:$0xff]
    %v195 = vld [vmem:[#allocation4 + $0xe0] sm:$0xff]
    %v196 = vld [vmem:[#allocation4 + $0xe8] sm:$0xff]
    %v197 = vld [vmem:[#allocation4 + $0xf0] sm:$0xff]
    %v198 = vld [vmem:[#allocation4 + $0xf8] sm:$0xff]
    %v199 = vld [vmem:[#allocation2 + $0x10] sm:$0x11]
    %v200 = vld [vmem:[#allocation2 + $0x28] sm:$0x11]
    %vm201 = vsmask.f32 3328
    %vm202 = vsmask.f32 7440
    %vm203 = vmor %vm201, %vm202
    %v205 = vshrl.u32 %v163, 16
    %v207 = vrot.slane %v205, 4
    %v208 = vshll.u32 %v163, 16
    %v210 = vrot.slane %v208, 5
    %v211 = vor.u32 %v207, %v210
    %v212 = vrot.slane %v211, 4
    %v214 = vshll.u32 %v164, 16
    %v216 = vrot.slane %v214, 5
    %v217 = vsel %vm203, %v212, %v216
    %v218 = vshrl.u32 %v164, 16
    %v220 = vrot.slane %v218, 4
    %v221 = vor.u32 %v220, %v216
    %v222 = vrot.slane %v221, 4
    %v224 = vshll.u32 %v199, 16
    %v226 = vrot.slane %v224, 5
    %v227 = vsel %vm203, %v222, %v226
    %v229 = vshrl.u32 %v165, 16
    %v231 = vrot.slane %v229, 4
    %v232 = vshll.u32 %v165, 16
    %v234 = vrot.slane %v232, 5
    %v235 = vor.u32 %v231, %v234
    %v236 = vrot.slane %v235, 4
    %v238 = vshll.u32 %v166, 16
    %v240 = vrot.slane %v238, 5
    %v241 = vsel %vm203, %v236, %v240
    %v242 = vshrl.u32 %v166, 16
    %v244 = vrot.slane %v242, 4
    %v245 = vor.u32 %v244, %v240
    %v246 = vrot.slane %v245, 4
    %v248 = vshll.u32 %v200, 16
    %v250 = vrot.slane %v248, 5
    %v251 = vsel %vm203, %v246, %v250
    %s252 = scalar_lea.vmem [#allocation4], 256
    %v253 = vld [vmem:[%s252] sm:$0xff]
    %v254 = vld [vmem:[%s252 + $0x8] sm:$0xff]
    %v255 = vld [vmem:[%s252 + $0x10] sm:$0xff]
    %v256 = vld [vmem:[%s252 + $0x18] sm:$0xff]
    %v257 = vld [vmem:[%s252 + $0x20] sm:$0xff]
    %v258 = vld [vmem:[%s252 + $0x28] sm:$0xff]
    %v259 = vld [vmem:[%s252 + $0x30] sm:$0xff]
    %v260 = vld [vmem:[%s252 + $0x38] sm:$0xff]
    %v261 = vld [vmem:[%s252 + $0x40] sm:$0xff]
    %v262 = vld [vmem:[%s252 + $0x48] sm:$0xff]
    %v263 = vld [vmem:[%s252 + $0x50] sm:$0xff]
    %v264 = vld [vmem:[%s252 + $0x58] sm:$0xff]
    %v265 = vld [vmem:[%s252 + $0x60] sm:$0xff]
    %v266 = vld [vmem:[%s252 + $0x68] sm:$0xff]
    %v267 = vld [vmem:[%s252 + $0x70] sm:$0xff]
    %v268 = vld [vmem:[%s252 + $0x78] sm:$0xff]
    %v269 = vld [vmem:[%s252 + $0x80] sm:$0xff]
    %v270 = vld [vmem:[%s252 + $0x88] sm:$0xff]
    %v271 = vld [vmem:[%s252 + $0x90] sm:$0xff]
    %v272 = vld [vmem:[%s252 + $0x98] sm:$0xff]
    %v273 = vld [vmem:[%s252 + $0xa0] sm:$0xff]
    %v274 = vld [vmem:[%s252 + $0xa8] sm:$0xff]
    %v275 = vld [vmem:[%s252 + $0xb0] sm:$0xff]
    %v276 = vld [vmem:[%s252 + $0xb8] sm:$0xff]
    %v277 = vld [vmem:[%s252 + $0xc0] sm:$0xff]
    %v278 = vld [vmem:[%s252 + $0xc8] sm:$0xff]
    %v279 = vld [vmem:[%s252 + $0xd0] sm:$0xff]
    %v280 = vld [vmem:[%s252 + $0xd8] sm:$0xff]
    %v281 = vld [vmem:[%s252 + $0xe0] sm:$0xff]
    %v282 = vld [vmem:[%s252 + $0xe8] sm:$0xff]
    %v283 = vld [vmem:[%s252 + $0xf0] sm:$0xff]
    %v284 = vld [vmem:[%s252 + $0xf8] sm:$0xff]
    %v285 = vunpack.c.l.b16 %v217
    %v286 = vunpack.c.h.b16 %v217
    %v287 = vunpack.c.l.b16 %v227
    %v288 = vunpack.c.h.b16 %v227
    %v289 = vunpack.c.l.b16 %v241
    %v290 = vunpack.c.h.b16 %v241
    %v291 = vunpack.c.l.b16 %v251
    %v292 = vunpack.c.h.b16 %v251
    %v293 = vpack.c.b16 %v287, %v285
    %v294 = vpack.c.b16 %v288, %v286
    %v295 = vpack.c.b16 %v291, %v289
    %v296 = vpack.c.b16 %v292, %v290
    %v333 = vunpack.c.l.b16 %v253
    %v334 = vunpack.c.h.b16 %v253
    %v335 = vunpack.c.l.b16 %v254
    %v336 = vunpack.c.h.b16 %v254
    %v337 = vunpack.c.l.b16 %v255
    %v338 = vunpack.c.h.b16 %v255
    %v339 = vunpack.c.l.b16 %v256
    %v340 = vunpack.c.h.b16 %v256
    %v341 = vunpack.c.l.b16 %v257
    %v342 = vunpack.c.h.b16 %v257
    %v343 = vunpack.c.l.b16 %v258
    %v344 = vunpack.c.h.b16 %v258
    %v345 = vunpack.c.l.b16 %v259
    %v346 = vunpack.c.h.b16 %v259
    %v347 = vunpack.c.l.b16 %v260
    %v348 = vunpack.c.h.b16 %v260
    %v349 = vunpack.c.l.b16 %v261
    %v350 = vunpack.c.h.b16 %v261
    %v351 = vunpack.c.l.b16 %v262
    %v352 = vunpack.c.h.b16 %v262
    %v353 = vunpack.c.l.b16 %v263
    %v354 = vunpack.c.h.b16 %v263
    %v355 = vunpack.c.l.b16 %v264
    %v356 = vunpack.c.h.b16 %v264
    %v357 = vunpack.c.l.b16 %v265
    %v358 = vunpack.c.h.b16 %v265
    %v359 = vunpack.c.l.b16 %v266
    %v360 = vunpack.c.h.b16 %v266
    %v361 = vunpack.c.l.b16 %v267
    %v362 = vunpack.c.h.b16 %v267
    %v363 = vunpack.c.l.b16 %v268
    %v364 = vunpack.c.h.b16 %v268
    %v365 = vunpack.c.l.b16 %v269
    %v366 = vunpack.c.h.b16 %v269
    %v367 = vunpack.c.l.b16 %v270
    %v368 = vunpack.c.h.b16 %v270
    %v369 = vunpack.c.l.b16 %v271
    %v370 = vunpack.c.h.b16 %v271
    %v371 = vunpack.c.l.b16 %v272
    %v372 = vunpack.c.h.b16 %v272
    %v373 = vunpack.c.l.b16 %v273
    %v374 = vunpack.c.h.b16 %v273
    %v375 = vunpack.c.l.b16 %v274
    %v376 = vunpack.c.h.b16 %v274
    %v377 = vunpack.c.l.b16 %v275
    %v378 = vunpack.c.h.b16 %v275
    %v379 = vunpack.c.l.b16 %v276
    %v380 = vunpack.c.h.b16 %v276
    %v381 = vunpack.c.l.b16 %v277
    %v382 = vunpack.c.h.b16 %v277
    %v383 = vunpack.c.l.b16 %v278
    %v384 = vunpack.c.h.b16 %v278
    %v385 = vunpack.c.l.b16 %v279
    %v386 = vunpack.c.h.b16 %v279
    %v387 = vunpack.c.l.b16 %v280
    %v388 = vunpack.c.h.b16 %v280
    %v389 = vunpack.c.l.b16 %v281
    %v390 = vunpack.c.h.b16 %v281
    %v391 = vunpack.c.l.b16 %v282
    %v392 = vunpack.c.h.b16 %v282
    %v393 = vunpack.c.l.b16 %v283
    %v394 = vunpack.c.h.b16 %v283
    %v395 = vunpack.c.l.b16 %v284
    %v396 = vunpack.c.h.b16 %v284
    %v397 = vpack.c.b16 %v335, %v333
    %v398 = vpack.c.b16 %v336, %v334
    %v399 = vpack.c.b16 %v339, %v337
    %v400 = vpack.c.b16 %v340, %v338
    %v401 = vpack.c.b16 %v343, %v341
    %v402 = vpack.c.b16 %v344, %v342
    %v403 = vpack.c.b16 %v347, %v345
    %v404 = vpack.c.b16 %v348, %v346
    %v405 = vpack.c.b16 %v351, %v349
    %v406 = vpack.c.b16 %v352, %v350
    %v407 = vpack.c.b16 %v355, %v353
    %v408 = vpack.c.b16 %v356, %v354
    %v409 = vpack.c.b16 %v359, %v357
    %v410 = vpack.c.b16 %v360, %v358
    %v411 = vpack.c.b16 %v363, %v361
    %v412 = vpack.c.b16 %v364, %v362
    %v413 = vpack.c.b16 %v367, %v365
    %v414 = vpack.c.b16 %v368, %v366
    %v415 = vpack.c.b16 %v371, %v369
    %v416 = vpack.c.b16 %v372, %v370
    %v417 = vpack.c.b16 %v375, %v373
    %v418 = vpack.c.b16 %v376, %v374
    %v419 = vpack.c.b16 %v379, %v377
    %v420 = vpack.c.b16 %v380, %v378
    %v421 = vpack.c.b16 %v383, %v381
    %v422 = vpack.c.b16 %v384, %v382
    %v423 = vpack.c.b16 %v387, %v385
    %v424 = vpack.c.b16 %v388, %v386
    %v425 = vpack.c.b16 %v391, %v389
    %v426 = vpack.c.b16 %v392, %v390
    %v427 = vpack.c.b16 %v395, %v393
    %v428 = vpack.c.b16 %v396, %v394
    %461 = vmatprep.subr.bf16.mxu0 %v412
    %462 = vmatpush1.bf16.msra.mxu0 %v411
    %463 = vmatprep.subr.bf16.mxu0 %v410
    %464 = vmatpush1.bf16.msra.mxu0 %v409
    %465 = vmatprep.subr.bf16.mxu0 %v408
    %466 = vmatpush1.bf16.msra.mxu0 %v407
    %467 = vmatprep.subr.bf16.mxu0 %v406
    %468 = vmatpush1.bf16.msra.mxu0 %v405
    %469 = vmatprep.subr.bf16.mxu0 %v404
    %470 = vmatpush1.bf16.msra.mxu0 %v403
    %471 = vmatprep.subr.bf16.mxu0 %v402
    %472 = vmatpush1.bf16.msra.mxu0 %v401
    %473 = vmatprep.subr.bf16.mxu0 %v400
    %474 = vmatpush1.bf16.msra.mxu0 %v399
    %475 = vmatprep.subr.bf16.mxu0 %v398
    %476 = vmatpush1.bf16.msra.mxu0 %v397
    %477 = vmatprep.subr.bf16.mxu0 %v428
    %478 = vmatpush2.bf16.msra.mxu0 %v427
    %479 = vmatprep.subr.bf16.mxu0 %v426
    %480 = vmatpush2.bf16.msra.mxu0 %v425
    %481 = vmatprep.subr.bf16.mxu0 %v424
    %482 = vmatpush2.bf16.msra.mxu0 %v423
    %483 = vmatprep.subr.bf16.mxu0 %v422
    %484 = vmatpush2.bf16.msra.mxu0 %v421
    %485 = vmatprep.subr.bf16.mxu0 %v420
    %486 = vmatpush2.bf16.msra.mxu0 %v419
    %487 = vmatprep.subr.bf16.mxu0 %v418
    %488 = vmatpush2.bf16.msra.mxu0 %v417
    %489 = vmatprep.subr.bf16.mxu0 %v416
    %490 = vmatpush2.bf16.msra.mxu0 %v415
    %491 = vmatprep.subr.bf16.mxu0 %v414
    %492 = vmatpush2.bf16.msra.mxu0 %v413
    %493 = vmatprep.mubr.bf16.mxu0 %v294
    %494 = vmatmul.mubr.bf16.gmra.mxu0 %v293
    %v495 = vpop.f32.mrf.mxu0
    %v496 = vadd.f32 0.0, %v495
    %v497 = vpop.f32.mrf.mxu0
    %v498 = vadd.f32 0.0, %v497
    %v499 = vpop.f32.mrf.mxu0
    %v500 = vadd.f32 0.0, %v499
    %v501 = vpop.f32.mrf.mxu0
    %v502 = vadd.f32 0.0, %v501
    %503 = vmatprep.mubr.bf16.mxu0 %v296
    %504 = vmatmul.mubr.bf16.gmra.mxu0 %v295
    %v505 = vpop.f32.mrf.mxu0
    %v506 = vadd.f32 0.0, %v505
    %v507 = vpop.f32.mrf.mxu0
    %v508 = vadd.f32 0.0, %v507
    %v509 = vpop.f32.mrf.mxu0
    %v510 = vadd.f32 0.0, %v509
    %v511 = vpop.f32.mrf.mxu0
    %v512 = vadd.f32 0.0, %v511
    %513 = vdwg.mxu0
    %v518 = vunpack.c.l.b16 %v163
    %v519 = vunpack.c.h.b16 %v163
    %v520 = vunpack.c.l.b16 %v164
    %v521 = vunpack.c.h.b16 %v164
    %v522 = vunpack.c.l.b16 %v165
    %v523 = vunpack.c.h.b16 %v165
    %v524 = vunpack.c.l.b16 %v166
    %v525 = vunpack.c.h.b16 %v166
    %v526 = vpack.c.b16 %v520, %v518
    %v527 = vpack.c.b16 %v521, %v519
    %v528 = vpack.c.b16 %v524, %v522
    %v529 = vpack.c.b16 %v525, %v523
    %v566 = vunpack.c.l.b16 %v167
    %v567 = vunpack.c.h.b16 %v167
    %v568 = vunpack.c.l.b16 %v168
    %v569 = vunpack.c.h.b16 %v168
    %v570 = vunpack.c.l.b16 %v169
    %v571 = vunpack.c.h.b16 %v169
    %v572 = vunpack.c.l.b16 %v170
    %v573 = vunpack.c.h.b16 %v170
    %v574 = vunpack.c.l.b16 %v171
    %v575 = vunpack.c.h.b16 %v171
    %v576 = vunpack.c.l.b16 %v172
    %v577 = vunpack.c.h.b16 %v172
    %v578 = vunpack.c.l.b16 %v173
    %v579 = vunpack.c.h.b16 %v173
    %v580 = vunpack.c.l.b16 %v174
    %v581 = vunpack.c.h.b16 %v174
    %v582 = vunpack.c.l.b16 %v175
    %v583 = vunpack.c.h.b16 %v175
    %v584 = vunpack.c.l.b16 %v176
    %v585 = vunpack.c.h.b16 %v176
    %v586 = vunpack.c.l.b16 %v177
    %v587 = vunpack.c.h.b16 %v177
    %v588 = vunpack.c.l.b16 %v178
    %v589 = vunpack.c.h.b16 %v178
    %v590 = vunpack.c.l.b16 %v179
    %v591 = vunpack.c.h.b16 %v179
    %v592 = vunpack.c.l.b16 %v180
    %v593 = vunpack.c.h.b16 %v180
    %v594 = vunpack.c.l.b16 %v181
    %v595 = vunpack.c.h.b16 %v181
    %v596 = vunpack.c.l.b16 %v182
    %v597 = vunpack.c.h.b16 %v182
    %v598 = vunpack.c.l.b16 %v183
    %v599 = vunpack.c.h.b16 %v183
    %v600 = vunpack.c.l.b16 %v184
    %v601 = vunpack.c.h.b16 %v184
    %v602 = vunpack.c.l.b16 %v185
    %v603 = vunpack.c.h.b16 %v185
    %v604 = vunpack.c.l.b16 %v186
    %v605 = vunpack.c.h.b16 %v186
    %v606 = vunpack.c.l.b16 %v187
    %v607 = vunpack.c.h.b16 %v187
    %v608 = vunpack.c.l.b16 %v188
    %v609 = vunpack.c.h.b16 %v188
    %v610 = vunpack.c.l.b16 %v189
    %v611 = vunpack.c.h.b16 %v189
    %v612 = vunpack.c.l.b16 %v190
    %v613 = vunpack.c.h.b16 %v190
    %v614 = vunpack.c.l.b16 %v191
    %v615 = vunpack.c.h.b16 %v191
    %v616 = vunpack.c.l.b16 %v192
    %v617 = vunpack.c.h.b16 %v192
    %v618 = vunpack.c.l.b16 %v193
    %v619 = vunpack.c.h.b16 %v193
    %v620 = vunpack.c.l.b16 %v194
    %v621 = vunpack.c.h.b16 %v194
    %v622 = vunpack.c.l.b16 %v195
    %v623 = vunpack.c.h.b16 %v195
    %v624 = vunpack.c.l.b16 %v196
    %v625 = vunpack.c.h.b16 %v196
    %v626 = vunpack.c.l.b16 %v197
    %v627 = vunpack.c.h.b16 %v197
    %v628 = vunpack.c.l.b16 %v198
    %v629 = vunpack.c.h.b16 %v198
    %v630 = vpack.c.b16 %v568, %v566
    %v631 = vpack.c.b16 %v569, %v567
    %v632 = vpack.c.b16 %v572, %v570
    %v633 = vpack.c.b16 %v573, %v571
    %v634 = vpack.c.b16 %v576, %v574
    %v635 = vpack.c.b16 %v577, %v575
    %v636 = vpack.c.b16 %v580, %v578
    %v637 = vpack.c.b16 %v581, %v579
    %v638 = vpack.c.b16 %v584, %v582
    %v639 = vpack.c.b16 %v585, %v583
    %v640 = vpack.c.b16 %v588, %v586
    %v641 = vpack.c.b16 %v589, %v587
    %v642 = vpack.c.b16 %v592, %v590
    %v643 = vpack.c.b16 %v593, %v591
    %v644 = vpack.c.b16 %v596, %v594
    %v645 = vpack.c.b16 %v597, %v595
    %v646 = vpack.c.b16 %v600, %v598
    %v647 = vpack.c.b16 %v601, %v599
    %v648 = vpack.c.b16 %v604, %v602
    %v649 = vpack.c.b16 %v605, %v603
    %v650 = vpack.c.b16 %v608, %v606
    %v651 = vpack.c.b16 %v609, %v607
    %v652 = vpack.c.b16 %v612, %v610
    %v653 = vpack.c.b16 %v613, %v611
    %v654 = vpack.c.b16 %v616, %v614
    %v655 = vpack.c.b16 %v617, %v615
    %v656 = vpack.c.b16 %v620, %v618
    %v657 = vpack.c.b16 %v621, %v619
    %v658 = vpack.c.b16 %v624, %v622
    %v659 = vpack.c.b16 %v625, %v623
    %v660 = vpack.c.b16 %v628, %v626
    %v661 = vpack.c.b16 %v629, %v627
    %694 = vmatprep.subr.bf16.mxu0 %v645
    %695 = vmatpush1.bf16.msra.mxu0 %v644
    %696 = vmatprep.subr.bf16.mxu0 %v643
    %697 = vmatpush1.bf16.msra.mxu0 %v642
    %698 = vmatprep.subr.bf16.mxu0 %v641
    %699 = vmatpush1.bf16.msra.mxu0 %v640
    %700 = vmatprep.subr.bf16.mxu0 %v639
    %701 = vmatpush1.bf16.msra.mxu0 %v638
    %702 = vmatprep.subr.bf16.mxu0 %v637
    %703 = vmatpush1.bf16.msra.mxu0 %v636
    %704 = vmatprep.subr.bf16.mxu0 %v635
    %705 = vmatpush1.bf16.msra.mxu0 %v634
    %706 = vmatprep.subr.bf16.mxu0 %v633
    %707 = vmatpush1.bf16.msra.mxu0 %v632
    %708 = vmatprep.subr.bf16.mxu0 %v631
    %709 = vmatpush1.bf16.msra.mxu0 %v630
    %710 = vmatprep.subr.bf16.mxu0 %v661
    %711 = vmatpush2.bf16.msra.mxu0 %v660
    %712 = vmatprep.subr.bf16.mxu0 %v659
    %713 = vmatpush2.bf16.msra.mxu0 %v658
    %714 = vmatprep.subr.bf16.mxu0 %v657
    %715 = vmatpush2.bf16.msra.mxu0 %v656
    %716 = vmatprep.subr.bf16.mxu0 %v655
    %717 = vmatpush2.bf16.msra.mxu0 %v654
    %718 = vmatprep.subr.bf16.mxu0 %v653
    %719 = vmatpush2.bf16.msra.mxu0 %v652
    %720 = vmatprep.subr.bf16.mxu0 %v651
    %721 = vmatpush2.bf16.msra.mxu0 %v650
    %722 = vmatprep.subr.bf16.mxu0 %v649
    %723 = vmatpush2.bf16.msra.mxu0 %v648
    %724 = vmatprep.subr.bf16.mxu0 %v647
    %725 = vmatpush2.bf16.msra.mxu0 %v646
    %726 = vmatprep.mubr.bf16.mxu0 %v527
    %727 = vmatmul.mubr.bf16.gmra.mxu0 %v526
    %v728 = vpop.f32.mrf.mxu0
    %v729 = vadd.f32 %v496, %v728
    %v730 = vpop.f32.mrf.mxu0
    %v731 = vadd.f32 %v498, %v730
    %v732 = vpop.f32.mrf.mxu0
    %v733 = vadd.f32 %v500, %v732
    %v734 = vpop.f32.mrf.mxu0
    %v735 = vadd.f32 %v502, %v734
    %736 = vmatprep.mubr.bf16.mxu0 %v529
    %737 = vmatmul.mubr.bf16.gmra.mxu0 %v528
    %v738 = vpop.f32.mrf.mxu0
    %v739 = vadd.f32 %v506, %v738
    %v740 = vpop.f32.mrf.mxu0
    %v741 = vadd.f32 %v508, %v740
    %v742 = vpop.f32.mrf.mxu0
    %v743 = vadd.f32 %v510, %v742
    %v744 = vpop.f32.mrf.mxu0
    %v745 = vadd.f32 %v512, %v744
    %746 = vdwg.mxu0
    %v747 = vld [vmem:[#allocation2] sm:$0xee]
    %v748 = vld [vmem:[#allocation2 + $0x18] sm:$0xee]
    %vm753 = vcmask 1042432
    %vm754 = vcmask 1046532
    %vm755 = vmor %vm753, %vm754
    %v756 = vrot.slane %v747, 5
    %v757 = vrot.slane %v756, 4
    %v758 = vrot.slane %v164, 5
    %v759 = vsel %vm755, %v757, %v758
    %v760 = vrot.slane %v758, 4
    %v761 = vrot.slane %v199, 5
    %v762 = vsel %vm755, %v760, %v761
    %v763 = vrot.slane %v748, 5
    %v764 = vrot.slane %v763, 4
    %v765 = vrot.slane %v166, 5
    %v766 = vsel %vm755, %v764, %v765
    %v767 = vrot.slane %v765, 4
    %v768 = vrot.slane %v200, 5
    %v769 = vsel %vm755, %v767, %v768
    %s770 = scalar_lea.vmem [#allocation4], 512
    %v771 = vld [vmem:[%s770] sm:$0xff]
    %v772 = vld [vmem:[%s770 + $0x8] sm:$0xff]
    %v773 = vld [vmem:[%s770 + $0x10] sm:$0xff]
    %v774 = vld [vmem:[%s770 + $0x18] sm:$0xff]
    %v775 = vld [vmem:[%s770 + $0x20] sm:$0xff]
    %v776 = vld [vmem:[%s770 + $0x28] sm:$0xff]
    %v777 = vld [vmem:[%s770 + $0x30] sm:$0xff]
    %v778 = vld [vmem:[%s770 + $0x38] sm:$0xff]
    %v779 = vld [vmem:[%s770 + $0x40] sm:$0xff]
    %v780 = vld [vmem:[%s770 + $0x48] sm:$0xff]
    %v781 = vld [vmem:[%s770 + $0x50] sm:$0xff]
    %v782 = vld [vmem:[%s770 + $0x58] sm:$0xff]
    %v783 = vld [vmem:[%s770 + $0x60] sm:$0xff]
    %v784 = vld [vmem:[%s770 + $0x68] sm:$0xff]
    %v785 = vld [vmem:[%s770 + $0x70] sm:$0xff]
    %v786 = vld [vmem:[%s770 + $0x78] sm:$0xff]
    %v787 = vld [vmem:[%s770 + $0x80] sm:$0xff]
    %v788 = vld [vmem:[%s770 + $0x88] sm:$0xff]
    %v789 = vld [vmem:[%s770 + $0x90] sm:$0xff]
    %v790 = vld [vmem:[%s770 + $0x98] sm:$0xff]
    %v791 = vld [vmem:[%s770 + $0xa0] sm:$0xff]
    %v792 = vld [vmem:[%s770 + $0xa8] sm:$0xff]
    %v793 = vld [vmem:[%s770 + $0xb0] sm:$0xff]
    %v794 = vld [vmem:[%s770 + $0xb8] sm:$0xff]
    %v795 = vld [vmem:[%s770 + $0xc0] sm:$0xff]
    %v796 = vld [vmem:[%s770 + $0xc8] sm:$0xff]
    %v797 = vld [vmem:[%s770 + $0xd0] sm:$0xff]
    %v798 = vld [vmem:[%s770 + $0xd8] sm:$0xff]
    %v799 = vld [vmem:[%s770 + $0xe0] sm:$0xff]
    %v800 = vld [vmem:[%s770 + $0xe8] sm:$0xff]
    %v801 = vld [vmem:[%s770 + $0xf0] sm:$0xff]
    %v802 = vld [vmem:[%s770 + $0xf8] sm:$0xff]
    %v803 = vunpack.c.l.b16 %v759
    %v804 = vunpack.c.h.b16 %v759
    %v805 = vunpack.c.l.b16 %v762
    %v806 = vunpack.c.h.b16 %v762
    %v807 = vunpack.c.l.b16 %v766
    %v808 = vunpack.c.h.b16 %v766
    %v809 = vunpack.c.l.b16 %v769
    %v810 = vunpack.c.h.b16 %v769
    %v811 = vpack.c.b16 %v805, %v803
    %v812 = vpack.c.b16 %v806, %v804
    %v813 = vpack.c.b16 %v809, %v807
    %v814 = vpack.c.b16 %v810, %v808
    %v851 = vunpack.c.l.b16 %v771
    %v852 = vunpack.c.h.b16 %v771
    %v853 = vunpack.c.l.b16 %v772
    %v854 = vunpack.c.h.b16 %v772
    %v855 = vunpack.c.l.b16 %v773
    %v856 = vunpack.c.h.b16 %v773
    %v857 = vunpack.c.l.b16 %v774
    %v858 = vunpack.c.h.b16 %v774
    %v859 = vunpack.c.l.b16 %v775
    %v860 = vunpack.c.h.b16 %v775
    %v861 = vunpack.c.l.b16 %v776
    %v862 = vunpack.c.h.b16 %v776
    %v863 = vunpack.c.l.b16 %v777
    %v864 = vunpack.c.h.b16 %v777
    %v865 = vunpack.c.l.b16 %v778
    %v866 = vunpack.c.h.b16 %v778
    %v867 = vunpack.c.l.b16 %v779
    %v868 = vunpack.c.h.b16 %v779
    %v869 = vunpack.c.l.b16 %v780
    %v870 = vunpack.c.h.b16 %v780
    %v871 = vunpack.c.l.b16 %v781
    %v872 = vunpack.c.h.b16 %v781
    %v873 = vunpack.c.l.b16 %v782
    %v874 = vunpack.c.h.b16 %v782
    %v875 = vunpack.c.l.b16 %v783
    %v876 = vunpack.c.h.b16 %v783
    %v877 = vunpack.c.l.b16 %v784
    %v878 = vunpack.c.h.b16 %v784
    %v879 = vunpack.c.l.b16 %v785
    %v880 = vunpack.c.h.b16 %v785
    %v881 = vunpack.c.l.b16 %v786
    %v882 = vunpack.c.h.b16 %v786
    %v883 = vunpack.c.l.b16 %v787
    %v884 = vunpack.c.h.b16 %v787
    %v885 = vunpack.c.l.b16 %v788
    %v886 = vunpack.c.h.b16 %v788
    %v887 = vunpack.c.l.b16 %v789
    %v888 = vunpack.c.h.b16 %v789
    %v889 = vunpack.c.l.b16 %v790
    %v890 = vunpack.c.h.b16 %v790
    %v891 = vunpack.c.l.b16 %v791
    %v892 = vunpack.c.h.b16 %v791
    %v893 = vunpack.c.l.b16 %v792
    %v894 = vunpack.c.h.b16 %v792
    %v895 = vunpack.c.l.b16 %v793
    %v896 = vunpack.c.h.b16 %v793
    %v897 = vunpack.c.l.b16 %v794
    %v898 = vunpack.c.h.b16 %v794
    %v899 = vunpack.c.l.b16 %v795
    %v900 = vunpack.c.h.b16 %v795
    %v901 = vunpack.c.l.b16 %v796
    %v902 = vunpack.c.h.b16 %v796
    %v903 = vunpack.c.l.b16 %v797
    %v904 = vunpack.c.h.b16 %v797
    %v905 = vunpack.c.l.b16 %v798
    %v906 = vunpack.c.h.b16 %v798
    %v907 = vunpack.c.l.b16 %v799
    %v908 = vunpack.c.h.b16 %v799
    %v909 = vunpack.c.l.b16 %v800
    %v910 = vunpack.c.h.b16 %v800
    %v911 = vunpack.c.l.b16 %v801
    %v912 = vunpack.c.h.b16 %v801
    %v913 = vunpack.c.l.b16 %v802
    %v914 = vunpack.c.h.b16 %v802
    %v915 = vpack.c.b16 %v853, %v851
    %v916 = vpack.c.b16 %v854, %v852
    %v917 = vpack.c.b16 %v857, %v855
    %v918 = vpack.c.b16 %v858, %v856
    %v919 = vpack.c.b16 %v861, %v859
    %v920 = vpack.c.b16 %v862, %v860
    %v921 = vpack.c.b16 %v865, %v863
    %v922 = vpack.c.b16 %v866, %v864
    %v923 = vpack.c.b16 %v869, %v867
    %v924 = vpack.c.b16 %v870, %v868
    %v925 = vpack.c.b16 %v873, %v871
    %v926 = vpack.c.b16 %v874, %v872
    %v927 = vpack.c.b16 %v877, %v875
    %v928 = vpack.c.b16 %v878, %v876
    %v929 = vpack.c.b16 %v881, %v879
    %v930 = vpack.c.b16 %v882, %v880
    %v931 = vpack.c.b16 %v885, %v883
    %v932 = vpack.c.b16 %v886, %v884
    %v933 = vpack.c.b16 %v889, %v887
    %v934 = vpack.c.b16 %v890, %v888
    %v935 = vpack.c.b16 %v893, %v891
    %v936 = vpack.c.b16 %v894, %v892
    %v937 = vpack.c.b16 %v897, %v895
    %v938 = vpack.c.b16 %v898, %v896
    %v939 = vpack.c.b16 %v901, %v899
    %v940 = vpack.c.b16 %v902, %v900
    %v941 = vpack.c.b16 %v905, %v903
    %v942 = vpack.c.b16 %v906, %v904
    %v943 = vpack.c.b16 %v909, %v907
    %v944 = vpack.c.b16 %v910, %v908
    %v945 = vpack.c.b16 %v913, %v911
    %v946 = vpack.c.b16 %v914, %v912
    %979 = vmatprep.subr.bf16.mxu0 %v930
    %980 = vmatpush1.bf16.msra.mxu0 %v929
    %981 = vmatprep.subr.bf16.mxu0 %v928
    %982 = vmatpush1.bf16.msra.mxu0 %v927
    %983 = vmatprep.subr.bf16.mxu0 %v926
    %984 = vmatpush1.bf16.msra.mxu0 %v925
    %985 = vmatprep.subr.bf16.mxu0 %v924
    %986 = vmatpush1.bf16.msra.mxu0 %v923
    %987 = vmatprep.subr.bf16.mxu0 %v922
    %988 = vmatpush1.bf16.msra.mxu0 %v921
    %989 = vmatprep.subr.bf16.mxu0 %v920
    %990 = vmatpush1.bf16.msra.mxu0 %v919
    %991 = vmatprep.subr.bf16.mxu0 %v918
    %992 = vmatpush1.bf16.msra.mxu0 %v917
    %993 = vmatprep.subr.bf16.mxu0 %v916
    %994 = vmatpush1.bf16.msra.mxu0 %v915
    %995 = vmatprep.subr.bf16.mxu0 %v946
    %996 = vmatpush2.bf16.msra.mxu0 %v945
    %997 = vmatprep.subr.bf16.mxu0 %v944
    %998 = vmatpush2.bf16.msra.mxu0 %v943
    %999 = vmatprep.subr.bf16.mxu0 %v942
    %1000 = vmatpush2.bf16.msra.mxu0 %v941
    %1001 = vmatprep.subr.bf16.mxu0 %v940
    %1002 = vmatpush2.bf16.msra.mxu0 %v939
    %1003 = vmatprep.subr.bf16.mxu0 %v938
    %1004 = vmatpush2.bf16.msra.mxu0 %v937
    %1005 = vmatprep.subr.bf16.mxu0 %v936
    %1006 = vmatpush2.bf16.msra.mxu0 %v935
    %1007 = vmatprep.subr.bf16.mxu0 %v934
    %1008 = vmatpush2.bf16.msra.mxu0 %v933
    %1009 = vmatprep.subr.bf16.mxu0 %v932
    %1010 = vmatpush2.bf16.msra.mxu0 %v931
    %1011 = vmatprep.mubr.bf16.mxu0 %v812
    %1012 = vmatmul.mubr.bf16.gmra.mxu0 %v811
    %v1013 = vpop.f32.mrf.mxu0
    %v1014 = vadd.f32 0.0, %v1013
    %v1015 = vpop.f32.mrf.mxu0
    %v1016 = vadd.f32 0.0, %v1015
    %v1017 = vpop.f32.mrf.mxu0
    %v1018 = vadd.f32 0.0, %v1017
    %v1019 = vpop.f32.mrf.mxu0
    %v1020 = vadd.f32 0.0, %v1019
    %1021 = vmatprep.mubr.bf16.mxu0 %v814
    %1022 = vmatmul.mubr.bf16.gmra.mxu0 %v813
    %v1023 = vpop.f32.mrf.mxu0
    %v1024 = vadd.f32 0.0, %v1023
    %v1025 = vpop.f32.mrf.mxu0
    %v1026 = vadd.f32 0.0, %v1025
    %v1027 = vpop.f32.mrf.mxu0
    %v1028 = vadd.f32 0.0, %v1027
    %v1029 = vpop.f32.mrf.mxu0
    %v1030 = vadd.f32 0.0, %v1029
    %1031 = vdwg.mxu0
    %v1032 = vadd.f32 %v729, %v1014
    %v1033 = vadd.f32 %v731, %v1016
    %v1034 = vadd.f32 %v733, %v1018
    %v1035 = vadd.f32 %v735, %v1020
    %v1036 = vadd.f32 %v739, %v1024
    %v1037 = vadd.f32 %v741, %v1026
    %v1038 = vadd.f32 %v743, %v1028
    %v1039 = vadd.f32 %v745, %v1030
    %v1040 = vld [vmem:[%s2] sm:$0x3]
    %v1042 = vlaneseq
    %v1043 = vshrl.u32 %v1042, 7
    %v1044 = vsub.s32 0, %v1043
    %v1045 = vrot.slane %v1040, %v1044
    %v1046 = vlaneseq
    %v1047 = vshrl.u32 %v1046, 7
    %v1048 = vsub.s32 1, %v1047
    %v1049 = vrot.slane %v1040, %v1048
    %v1052 = vmul.f32 %v1032, %v1045
    %v1053 = vmul.f32 %v1033, %v1049
    %v1054 = vmul.f32 %v1034, %v1045
    %v1055 = vmul.f32 %v1035, %v1049
    %v1056 = vmul.f32 %v1036, %v1045
    %v1057 = vmul.f32 %v1037, %v1049
    %v1058 = vmul.f32 %v1038, %v1045
    %v1059 = vmul.f32 %v1039, %v1049
    %v1060 = vld [vmem:[%s3] sm:$0x3]
    %v1062 = vlaneseq
    %v1063 = vshrl.u32 %v1062, 7
    %v1064 = vsub.s32 0, %v1063
    %v1065 = vrot.slane %v1060, %v1064
    %v1066 = vlaneseq
    %v1067 = vshrl.u32 %v1066, 7
    %v1068 = vsub.s32 1, %v1067
    %v1069 = vrot.slane %v1060, %v1068
    %v1072 = vadd.f32 %v1052, %v1065
    %v1073 = vadd.f32 %v1053, %v1069
    %v1074 = vadd.f32 %v1054, %v1065
    %v1075 = vadd.f32 %v1055, %v1069
    %v1076 = vadd.f32 %v1056, %v1065
    %v1077 = vadd.f32 %v1057, %v1069
    %v1078 = vadd.f32 %v1058, %v1065
    %v1079 = vadd.f32 %v1059, %v1069
    %v1080 = vmax.f32 %v1072, 0.0
    %v1081 = vmax.f32 %v1073, 0.0
    %v1082 = vmax.f32 %v1074, 0.0
    %v1083 = vmax.f32 %v1075, 0.0
    %v1084 = vmax.f32 %v1076, 0.0
    %v1085 = vmax.f32 %v1077, 0.0
    %v1086 = vmax.f32 %v1078, 0.0
    %v1087 = vmax.f32 %v1079, 0.0
    %v1088 = vmin.f32 %v1080, 6.0
    %v1089 = vmin.f32 %v1081, 6.0
    %v1090 = vmin.f32 %v1082, 6.0
    %v1091 = vmin.f32 %v1083, 6.0
    %v1092 = vmin.f32 %v1084, 6.0
    %v1093 = vmin.f32 %v1085, 6.0
    %v1094 = vmin.f32 %v1086, 6.0
    %v1095 = vmin.f32 %v1087, 6.0
    %v1096 = vpack.c.bf16 %v1090, %v1088
    %v1097 = vpack.c.bf16 %v1091, %v1089
    %v1098 = vpack.c.bf16 %v1094, %v1092
    %v1099 = vpack.c.bf16 %v1095, %v1093
    %v1104 = vunpack.c.l.b16 %v1096
    %v1105 = vunpack.c.l.b16 %v1097
    %v1106 = vunpack.c.h.b16 %v1096
    %v1107 = vunpack.c.h.b16 %v1097
    %v1108 = vunpack.c.l.b16 %v1098
    %v1109 = vunpack.c.l.b16 %v1099
    %v1110 = vunpack.c.h.b16 %v1098
    %v1111 = vunpack.c.h.b16 %v1099
    %v1112 = vpack.c.b16 %v1105, %v1104
    %v1113 = vpack.c.b16 %v1107, %v1106
    %v1114 = vpack.c.b16 %v1109, %v1108
    %v1115 = vpack.c.b16 %v1111, %v1110
    %v1117 = vshrl.u32 %v1112, 16
    %v1119 = vrot.slane %v1117, 7
    %v1120 = vshll.u32 %v1112, 16
    %v1122 = vor.u32 %v1119, %v1120
    %v1123 = vrot.slane %v1119, 4
    %v1125 = vshrl.u32 %v1113, 16
    %v1127 = vrot.slane %v1125, 7
    %v1128 = vshll.u32 %v1113, 16
    %v1130 = vor.u32 %v1127, %v1128
    %v1131 = vsel %vm103, %v1123, %v1130
    %v1132 = vrot.slane %v1127, 4
    %v1134 = vshrl.u32 %v1114, 16
    %v1136 = vrot.slane %v1134, 7
    %v1137 = vshll.u32 %v1114, 16
    %v1139 = vor.u32 %v1136, %v1137
    %v1140 = vrot.slane %v1136, 4
    %v1142 = vshrl.u32 %v1115, 16
    %v1144 = vrot.slane %v1142, 7
    %v1145 = vshll.u32 %v1115, 16
    %v1147 = vor.u32 %v1144, %v1145
    %v1148 = vsel %vm103, %v1140, %v1147
    %v1149 = vrot.slane %v1144, 4
    %v1156 = vld [vmem:[#allocation3] sm:$0xff]
    %v1157 = vsel %vm148, %v1122, %v1156
    %1158 = vst [vmem:[#allocation3] sm:$0xff] %v1157
    %1159 = vst [vmem:[#allocation3 + $0x8] sm:$0xff] %v1131
    %v1160 = vld [vmem:[#allocation3 + $0x10] sm:$0x11]
    %v1161 = vsel %vm68, %v1132, %v1160
    %1162 = vst [vmem:[#allocation3 + $0x10] sm:$0x11] %v1161
    %v1163 = vld [vmem:[#allocation3 + $0x18] sm:$0xff]
    %v1164 = vsel %vm148, %v1139, %v1163
    %1165 = vst [vmem:[#allocation3 + $0x18] sm:$0xff] %v1164
    %1166 = vst [vmem:[#allocation3 + $0x20] sm:$0xff] %v1148
    %v1167 = vld [vmem:[#allocation3 + $0x28] sm:$0x11]
    %v1168 = vsel %vm68, %v1149, %v1167
    %1169 = vst [vmem:[#allocation3 + $0x28] sm:$0x11] %v1168
    %v1170 = vld [vmem:[#allocation3] sm:$0xff]
    %v1171 = vld [vmem:[#allocation3 + $0x8] sm:$0xff]
    %v1172 = vld [vmem:[#allocation3 + $0x18] sm:$0xff]
    %v1173 = vld [vmem:[#allocation3 + $0x20] sm:$0xff]
    %v1174 = vld [vmem:[#allocation7] sm:$0xff]
    %v1175 = vld [vmem:[#allocation7 + $0x8] sm:$0xff]
    %v1176 = vld [vmem:[#allocation7 + $0x10] sm:$0xff]
    %v1177 = vld [vmem:[#allocation7 + $0x18] sm:$0xff]
    %v1178 = vld [vmem:[#allocation7 + $0x20] sm:$0xff]
    %v1179 = vld [vmem:[#allocation7 + $0x28] sm:$0xff]
    %v1180 = vld [vmem:[#allocation7 + $0x30] sm:$0xff]
    %v1181 = vld [vmem:[#allocation7 + $0x38] sm:$0xff]
    %v1182 = vld [vmem:[#allocation7 + $0x40] sm:$0xff]
    %v1183 = vld [vmem:[#allocation7 + $0x48] sm:$0xff]
    %v1184 = vld [vmem:[#allocation7 + $0x50] sm:$0xff]
    %v1185 = vld [vmem:[#allocation7 + $0x58] sm:$0xff]
    %v1186 = vld [vmem:[#allocation7 + $0x60] sm:$0xff]
    %v1187 = vld [vmem:[#allocation7 + $0x68] sm:$0xff]
    %v1188 = vld [vmem:[#allocation7 + $0x70] sm:$0xff]
    %v1189 = vld [vmem:[#allocation7 + $0x78] sm:$0xff]
    %v1190 = vld [vmem:[#allocation7 + $0x80] sm:$0xff]
    %v1191 = vld [vmem:[#allocation7 + $0x88] sm:$0xff]
    %v1192 = vld [vmem:[#allocation7 + $0x90] sm:$0xff]
    %v1193 = vld [vmem:[#allocation7 + $0x98] sm:$0xff]
    %v1194 = vld [vmem:[#allocation7 + $0xa0] sm:$0xff]
    %v1195 = vld [vmem:[#allocation7 + $0xa8] sm:$0xff]
    %v1196 = vld [vmem:[#allocation7 + $0xb0] sm:$0xff]
    %v1197 = vld [vmem:[#allocation7 + $0xb8] sm:$0xff]
    %v1198 = vld [vmem:[#allocation7 + $0xc0] sm:$0xff]
    %v1199 = vld [vmem:[#allocation7 + $0xc8] sm:$0xff]
    %v1200 = vld [vmem:[#allocation7 + $0xd0] sm:$0xff]
    %v1201 = vld [vmem:[#allocation7 + $0xd8] sm:$0xff]
    %v1202 = vld [vmem:[#allocation7 + $0xe0] sm:$0xff]
    %v1203 = vld [vmem:[#allocation7 + $0xe8] sm:$0xff]
    %v1204 = vld [vmem:[#allocation7 + $0xf0] sm:$0xff]
    %v1205 = vld [vmem:[#allocation7 + $0xf8] sm:$0xff]
    %v1206 = vld [vmem:[#allocation3 + $0x10] sm:$0x11]
    %v1207 = vld [vmem:[#allocation3 + $0x28] sm:$0x11]
    %v1209 = vshrl.u32 %v1170, 16
    %v1211 = vrot.slane %v1209, 4
    %v1212 = vshll.u32 %v1170, 16
    %v1214 = vrot.slane %v1212, 5
    %v1215 = vor.u32 %v1211, %v1214
    %v1216 = vrot.slane %v1215, 4
    %v1218 = vshll.u32 %v1171, 16
    %v1220 = vrot.slane %v1218, 5
    %v1221 = vsel %vm203, %v1216, %v1220
    %v1222 = vshrl.u32 %v1171, 16
    %v1224 = vrot.slane %v1222, 4
    %v1225 = vor.u32 %v1224, %v1220
    %v1226 = vrot.slane %v1225, 4
    %v1228 = vshll.u32 %v1206, 16
    %v1230 = vrot.slane %v1228, 5
    %v1231 = vsel %vm203, %v1226, %v1230
    %v1233 = vshrl.u32 %v1172, 16
    %v1235 = vrot.slane %v1233, 4
    %v1236 = vshll.u32 %v1172, 16
    %v1238 = vrot.slane %v1236, 5
    %v1239 = vor.u32 %v1235, %v1238
    %v1240 = vrot.slane %v1239, 4
    %v1242 = vshll.u32 %v1173, 16
    %v1244 = vrot.slane %v1242, 5
    %v1245 = vsel %vm203, %v1240, %v1244
    %v1246 = vshrl.u32 %v1173, 16
    %v1248 = vrot.slane %v1246, 4
    %v1249 = vor.u32 %v1248, %v1244
    %v1250 = vrot.slane %v1249, 4
    %v1252 = vshll.u32 %v1207, 16
    %v1254 = vrot.slane %v1252, 5
    %v1255 = vsel %vm203, %v1250, %v1254
    %s1256 = scalar_lea.vmem [#allocation7], 256
    %v1257 = vld [vmem:[%s1256] sm:$0xff]
    %v1258 = vld [vmem:[%s1256 + $0x8] sm:$0xff]
    %v1259 = vld [vmem:[%s1256 + $0x10] sm:$0xff]
    %v1260 = vld [vmem:[%s1256 + $0x18] sm:$0xff]
    %v1261 = vld [vmem:[%s1256 + $0x20] sm:$0xff]
    %v1262 = vld [vmem:[%s1256 + $0x28] sm:$0xff]
    %v1263 = vld [vmem:[%s1256 + $0x30] sm:$0xff]
    %v1264 = vld [vmem:[%s1256 + $0x38] sm:$0xff]
    %v1265 = vld [vmem:[%s1256 + $0x40] sm:$0xff]
    %v1266 = vld [vmem:[%s1256 + $0x48] sm:$0xff]
    %v1267 = vld [vmem:[%s1256 + $0x50] sm:$0xff]
    %v1268 = vld [vmem:[%s1256 + $0x58] sm:$0xff]
    %v1269 = vld [vmem:[%s1256 + $0x60] sm:$0xff]
    %v1270 = vld [vmem:[%s1256 + $0x68] sm:$0xff]
    %v1271 = vld [vmem:[%s1256 + $0x70] sm:$0xff]
    %v1272 = vld [vmem:[%s1256 + $0x78] sm:$0xff]
    %v1273 = vld [vmem:[%s1256 + $0x80] sm:$0xff]
    %v1274 = vld [vmem:[%s1256 + $0x88] sm:$0xff]
    %v1275 = vld [vmem:[%s1256 + $0x90] sm:$0xff]
    %v1276 = vld [vmem:[%s1256 + $0x98] sm:$0xff]
    %v1277 = vld [vmem:[%s1256 + $0xa0] sm:$0xff]
    %v1278 = vld [vmem:[%s1256 + $0xa8] sm:$0xff]
    %v1279 = vld [vmem:[%s1256 + $0xb0] sm:$0xff]
    %v1280 = vld [vmem:[%s1256 + $0xb8] sm:$0xff]
    %v1281 = vld [vmem:[%s1256 + $0xc0] sm:$0xff]
    %v1282 = vld [vmem:[%s1256 + $0xc8] sm:$0xff]
    %v1283 = vld [vmem:[%s1256 + $0xd0] sm:$0xff]
    %v1284 = vld [vmem:[%s1256 + $0xd8] sm:$0xff]
    %v1285 = vld [vmem:[%s1256 + $0xe0] sm:$0xff]
    %v1286 = vld [vmem:[%s1256 + $0xe8] sm:$0xff]
    %v1287 = vld [vmem:[%s1256 + $0xf0] sm:$0xff]
    %v1288 = vld [vmem:[%s1256 + $0xf8] sm:$0xff]
    %v1289 = vunpack.c.l.b16 %v1221
    %v1290 = vunpack.c.h.b16 %v1221
    %v1291 = vunpack.c.l.b16 %v1231
    %v1292 = vunpack.c.h.b16 %v1231
    %v1293 = vunpack.c.l.b16 %v1245
    %v1294 = vunpack.c.h.b16 %v1245
    %v1295 = vunpack.c.l.b16 %v1255
    %v1296 = vunpack.c.h.b16 %v1255
    %v1297 = vpack.c.b16 %v1291, %v1289
    %v1298 = vpack.c.b16 %v1292, %v1290
    %v1299 = vpack.c.b16 %v1295, %v1293
    %v1300 = vpack.c.b16 %v1296, %v1294
    %v1337 = vunpack.c.l.b16 %v1257
    %v1338 = vunpack.c.h.b16 %v1257
    %v1339 = vunpack.c.l.b16 %v1258
    %v1340 = vunpack.c.h.b16 %v1258
    %v1341 = vunpack.c.l.b16 %v1259
    %v1342 = vunpack.c.h.b16 %v1259
    %v1343 = vunpack.c.l.b16 %v1260
    %v1344 = vunpack.c.h.b16 %v1260
    %v1345 = vunpack.c.l.b16 %v1261
    %v1346 = vunpack.c.h.b16 %v1261
    %v1347 = vunpack.c.l.b16 %v1262
    %v1348 = vunpack.c.h.b16 %v1262
    %v1349 = vunpack.c.l.b16 %v1263
    %v1350 = vunpack.c.h.b16 %v1263
    %v1351 = vunpack.c.l.b16 %v1264
    %v1352 = vunpack.c.h.b16 %v1264
    %v1353 = vunpack.c.l.b16 %v1265
    %v1354 = vunpack.c.h.b16 %v1265
    %v1355 = vunpack.c.l.b16 %v1266
    %v1356 = vunpack.c.h.b16 %v1266
    %v1357 = vunpack.c.l.b16 %v1267
    %v1358 = vunpack.c.h.b16 %v1267
    %v1359 = vunpack.c.l.b16 %v1268
    %v1360 = vunpack.c.h.b16 %v1268
    %v1361 = vunpack.c.l.b16 %v1269
    %v1362 = vunpack.c.h.b16 %v1269
    %v1363 = vunpack.c.l.b16 %v1270
    %v1364 = vunpack.c.h.b16 %v1270
    %v1365 = vunpack.c.l.b16 %v1271
    %v1366 = vunpack.c.h.b16 %v1271
    %v1367 = vunpack.c.l.b16 %v1272
    %v1368 = vunpack.c.h.b16 %v1272
    %v1369 = vunpack.c.l.b16 %v1273
    %v1370 = vunpack.c.h.b16 %v1273
    %v1371 = vunpack.c.l.b16 %v1274
    %v1372 = vunpack.c.h.b16 %v1274
    %v1373 = vunpack.c.l.b16 %v1275
    %v1374 = vunpack.c.h.b16 %v1275
    %v1375 = vunpack.c.l.b16 %v1276
    %v1376 = vunpack.c.h.b16 %v1276
    %v1377 = vunpack.c.l.b16 %v1277
    %v1378 = vunpack.c.h.b16 %v1277
    %v1379 = vunpack.c.l.b16 %v1278
    %v1380 = vunpack.c.h.b16 %v1278
    %v1381 = vunpack.c.l.b16 %v1279
    %v1382 = vunpack.c.h.b16 %v1279
    %v1383 = vunpack.c.l.b16 %v1280
    %v1384 = vunpack.c.h.b16 %v1280
    %v1385 = vunpack.c.l.b16 %v1281
    %v1386 = vunpack.c.h.b16 %v1281
    %v1387 = vunpack.c.l.b16 %v1282
    %v1388 = vunpack.c.h.b16 %v1282
    %v1389 = vunpack.c.l.b16 %v1283
    %v1390 = vunpack.c.h.b16 %v1283
    %v1391 = vunpack.c.l.b16 %v1284
    %v1392 = vunpack.c.h.b16 %v1284
    %v1393 = vunpack.c.l.b16 %v1285
    %v1394 = vunpack.c.h.b16 %v1285
    %v1395 = vunpack.c.l.b16 %v1286
    %v1396 = vunpack.c.h.b16 %v1286
    %v1397 = vunpack.c.l.b16 %v1287
    %v1398 = vunpack.c.h.b16 %v1287
    %v1399 = vunpack.c.l.b16 %v1288
    %v1400 = vunpack.c.h.b16 %v1288
    %v1401 = vpack.c.b16 %v1339, %v1337
    %v1402 = vpack.c.b16 %v1340, %v1338
    %v1403 = vpack.c.b16 %v1343, %v1341
    %v1404 = vpack.c.b16 %v1344, %v1342
    %v1405 = vpack.c.b16 %v1347, %v1345
    %v1406 = vpack.c.b16 %v1348, %v1346
    %v1407 = vpack.c.b16 %v1351, %v1349
    %v1408 = vpack.c.b16 %v1352, %v1350
    %v1409 = vpack.c.b16 %v1355, %v1353
    %v1410 = vpack.c.b16 %v1356, %v1354
    %v1411 = vpack.c.b16 %v1359, %v1357
    %v1412 = vpack.c.b16 %v1360, %v1358
    %v1413 = vpack.c.b16 %v1363, %v1361
    %v1414 = vpack.c.b16 %v1364, %v1362
    %v1415 = vpack.c.b16 %v1367, %v1365
    %v1416 = vpack.c.b16 %v1368, %v1366
    %v1417 = vpack.c.b16 %v1371, %v1369
    %v1418 = vpack.c.b16 %v1372, %v1370
    %v1419 = vpack.c.b16 %v1375, %v1373
    %v1420 = vpack.c.b16 %v1376, %v1374
    %v1421 = vpack.c.b16 %v1379, %v1377
    %v1422 = vpack.c.b16 %v1380, %v1378
    %v1423 = vpack.c.b16 %v1383, %v1381
    %v1424 = vpack.c.b16 %v1384, %v1382
    %v1425 = vpack.c.b16 %v1387, %v1385
    %v1426 = vpack.c.b16 %v1388, %v1386
    %v1427 = vpack.c.b16 %v1391, %v1389
    %v1428 = vpack.c.b16 %v1392, %v1390
    %v1429 = vpack.c.b16 %v1395, %v1393
    %v1430 = vpack.c.b16 %v1396, %v1394
    %v1431 = vpack.c.b16 %v1399, %v1397
    %v1432 = vpack.c.b16 %v1400, %v1398
    %1465 = vmatprep.subr.bf16.mxu0 %v1416
    %1466 = vmatpush1.bf16.msra.mxu0 %v1415
    %1467 = vmatprep.subr.bf16.mxu0 %v1414
    %1468 = vmatpush1.bf16.msra.mxu0 %v1413
    %1469 = vmatprep.subr.bf16.mxu0 %v1412
    %1470 = vmatpush1.bf16.msra.mxu0 %v1411
    %1471 = vmatprep.subr.bf16.mxu0 %v1410
    %1472 = vmatpush1.bf16.msra.mxu0 %v1409
    %1473 = vmatprep.subr.bf16.mxu0 %v1408
    %1474 = vmatpush1.bf16.msra.mxu0 %v1407
    %1475 = vmatprep.subr.bf16.mxu0 %v1406
    %1476 = vmatpush1.bf16.msra.mxu0 %v1405
    %1477 = vmatprep.subr.bf16.mxu0 %v1404
    %1478 = vmatpush1.bf16.msra.mxu0 %v1403
    %1479 = vmatprep.subr.bf16.mxu0 %v1402
    %1480 = vmatpush1.bf16.msra.mxu0 %v1401
    %1481 = vmatprep.subr.bf16.mxu0 %v1432
    %1482 = vmatpush2.bf16.msra.mxu0 %v1431
    %1483 = vmatprep.subr.bf16.mxu0 %v1430
    %1484 = vmatpush2.bf16.msra.mxu0 %v1429
    %1485 = vmatprep.subr.bf16.mxu0 %v1428
    %1486 = vmatpush2.bf16.msra.mxu0 %v1427
    %1487 = vmatprep.subr.bf16.mxu0 %v1426
    %1488 = vmatpush2.bf16.msra.mxu0 %v1425
    %1489 = vmatprep.subr.bf16.mxu0 %v1424
    %1490 = vmatpush2.bf16.msra.mxu0 %v1423
    %1491 = vmatprep.subr.bf16.mxu0 %v1422
    %1492 = vmatpush2.bf16.msra.mxu0 %v1421
    %1493 = vmatprep.subr.bf16.mxu0 %v1420
    %1494 = vmatpush2.bf16.msra.mxu0 %v1419
    %1495 = vmatprep.subr.bf16.mxu0 %v1418
    %1496 = vmatpush2.bf16.msra.mxu0 %v1417
    %1497 = vmatprep.mubr.bf16.mxu0 %v1298
    %1498 = vmatmul.mubr.bf16.gmra.mxu0 %v1297
    %v1499 = vpop.f32.mrf.mxu0
    %v1500 = vadd.f32 0.0, %v1499
    %v1501 = vpop.f32.mrf.mxu0
    %v1502 = vadd.f32 0.0, %v1501
    %v1503 = vpop.f32.mrf.mxu0
    %v1504 = vadd.f32 0.0, %v1503
    %v1505 = vpop.f32.mrf.mxu0
    %v1506 = vadd.f32 0.0, %v1505
    %1507 = vmatprep.mubr.bf16.mxu0 %v1300
    %1508 = vmatmul.mubr.bf16.gmra.mxu0 %v1299
    %v1509 = vpop.f32.mrf.mxu0
    %v1510 = vadd.f32 0.0, %v1509
    %v1511 = vpop.f32.mrf.mxu0
    %v1512 = vadd.f32 0.0, %v1511
    %v1513 = vpop.f32.mrf.mxu0
    %v1514 = vadd.f32 0.0, %v1513
    %v1515 = vpop.f32.mrf.mxu0
    %v1516 = vadd.f32 0.0, %v1515
    %1517 = vdwg.mxu0
    %v1522 = vunpack.c.l.b16 %v1170
    %v1523 = vunpack.c.h.b16 %v1170
    %v1524 = vunpack.c.l.b16 %v1171
    %v1525 = vunpack.c.h.b16 %v1171
    %v1526 = vunpack.c.l.b16 %v1172
    %v1527 = vunpack.c.h.b16 %v1172
    %v1528 = vunpack.c.l.b16 %v1173
    %v1529 = vunpack.c.h.b16 %v1173
    %v1530 = vpack.c.b16 %v1524, %v1522
    %v1531 = vpack.c.b16 %v1525, %v1523
    %v1532 = vpack.c.b16 %v1528, %v1526
    %v1533 = vpack.c.b16 %v1529, %v1527
    %v1570 = vunpack.c.l.b16 %v1174
    %v1571 = vunpack.c.h.b16 %v1174
    %v1572 = vunpack.c.l.b16 %v1175
    %v1573 = vunpack.c.h.b16 %v1175
    %v1574 = vunpack.c.l.b16 %v1176
    %v1575 = vunpack.c.h.b16 %v1176
    %v1576 = vunpack.c.l.b16 %v1177
    %v1577 = vunpack.c.h.b16 %v1177
    %v1578 = vunpack.c.l.b16 %v1178
    %v1579 = vunpack.c.h.b16 %v1178
    %v1580 = vunpack.c.l.b16 %v1179
    %v1581 = vunpack.c.h.b16 %v1179
    %v1582 = vunpack.c.l.b16 %v1180
    %v1583 = vunpack.c.h.b16 %v1180
    %v1584 = vunpack.c.l.b16 %v1181
    %v1585 = vunpack.c.h.b16 %v1181
    %v1586 = vunpack.c.l.b16 %v1182
    %v1587 = vunpack.c.h.b16 %v1182
    %v1588 = vunpack.c.l.b16 %v1183
    %v1589 = vunpack.c.h.b16 %v1183
    %v1590 = vunpack.c.l.b16 %v1184
    %v1591 = vunpack.c.h.b16 %v1184
    %v1592 = vunpack.c.l.b16 %v1185
    %v1593 = vunpack.c.h.b16 %v1185
    %v1594 = vunpack.c.l.b16 %v1186
    %v1595 = vunpack.c.h.b16 %v1186
    %v1596 = vunpack.c.l.b16 %v1187
    %v1597 = vunpack.c.h.b16 %v1187
    %v1598 = vunpack.c.l.b16 %v1188
    %v1599 = vunpack.c.h.b16 %v1188
    %v1600 = vunpack.c.l.b16 %v1189
    %v1601 = vunpack.c.h.b16 %v1189
    %v1602 = vunpack.c.l.b16 %v1190
    %v1603 = vunpack.c.h.b16 %v1190
    %v1604 = vunpack.c.l.b16 %v1191
    %v1605 = vunpack.c.h.b16 %v1191
    %v1606 = vunpack.c.l.b16 %v1192
    %v1607 = vunpack.c.h.b16 %v1192
    %v1608 = vunpack.c.l.b16 %v1193
    %v1609 = vunpack.c.h.b16 %v1193
    %v1610 = vunpack.c.l.b16 %v1194
    %v1611 = vunpack.c.h.b16 %v1194
    %v1612 = vunpack.c.l.b16 %v1195
    %v1613 = vunpack.c.h.b16 %v1195
    %v1614 = vunpack.c.l.b16 %v1196
    %v1615 = vunpack.c.h.b16 %v1196
    %v1616 = vunpack.c.l.b16 %v1197
    %v1617 = vunpack.c.h.b16 %v1197
    %v1618 = vunpack.c.l.b16 %v1198
    %v1619 = vunpack.c.h.b16 %v1198
    %v1620 = vunpack.c.l.b16 %v1199
    %v1621 = vunpack.c.h.b16 %v1199
    %v1622 = vunpack.c.l.b16 %v1200
    %v1623 = vunpack.c.h.b16 %v1200
    %v1624 = vunpack.c.l.b16 %v1201
    %v1625 = vunpack.c.h.b16 %v1201
    %v1626 = vunpack.c.l.b16 %v1202
    %v1627 = vunpack.c.h.b16 %v1202
    %v1628 = vunpack.c.l.b16 %v1203
    %v1629 = vunpack.c.h.b16 %v1203
    %v1630 = vunpack.c.l.b16 %v1204
    %v1631 = vunpack.c.h.b16 %v1204
    %v1632 = vunpack.c.l.b16 %v1205
    %v1633 = vunpack.c.h.b16 %v1205
    %v1634 = vpack.c.b16 %v1572, %v1570
    %v1635 = vpack.c.b16 %v1573, %v1571
    %v1636 = vpack.c.b16 %v1576, %v1574
    %v1637 = vpack.c.b16 %v1577, %v1575
    %v1638 = vpack.c.b16 %v1580, %v1578
    %v1639 = vpack.c.b16 %v1581, %v1579
    %v1640 = vpack.c.b16 %v1584, %v1582
    %v1641 = vpack.c.b16 %v1585, %v1583
    %v1642 = vpack.c.b16 %v1588, %v1586
    %v1643 = vpack.c.b16 %v1589, %v1587
    %v1644 = vpack.c.b16 %v1592, %v1590
    %v1645 = vpack.c.b16 %v1593, %v1591
    %v1646 = vpack.c.b16 %v1596, %v1594
    %v1647 = vpack.c.b16 %v1597, %v1595
    %v1648 = vpack.c.b16 %v1600, %v1598
    %v1649 = vpack.c.b16 %v1601, %v1599
    %v1650 = vpack.c.b16 %v1604, %v1602
    %v1651 = vpack.c.b16 %v1605, %v1603
    %v1652 = vpack.c.b16 %v1608, %v1606
    %v1653 = vpack.c.b16 %v1609, %v1607
    %v1654 = vpack.c.b16 %v1612, %v1610
    %v1655 = vpack.c.b16 %v1613, %v1611
    %v1656 = vpack.c.b16 %v1616, %v1614
    %v1657 = vpack.c.b16 %v1617, %v1615
    %v1658 = vpack.c.b16 %v1620, %v1618
    %v1659 = vpack.c.b16 %v1621, %v1619
    %v1660 = vpack.c.b16 %v1624, %v1622
    %v1661 = vpack.c.b16 %v1625, %v1623
    %v1662 = vpack.c.b16 %v1628, %v1626
    %v1663 = vpack.c.b16 %v1629, %v1627
    %v1664 = vpack.c.b16 %v1632, %v1630
    %v1665 = vpack.c.b16 %v1633, %v1631
    %1698 = vmatprep.subr.bf16.mxu0 %v1649
    %1699 = vmatpush1.bf16.msra.mxu0 %v1648
    %1700 = vmatprep.subr.bf16.mxu0 %v1647
    %1701 = vmatpush1.bf16.msra.mxu0 %v1646
    %1702 = vmatprep.subr.bf16.mxu0 %v1645
    %1703 = vmatpush1.bf16.msra.mxu0 %v1644
    %1704 = vmatprep.subr.bf16.mxu0 %v1643
    %1705 = vmatpush1.bf16.msra.mxu0 %v1642
    %1706 = vmatprep.subr.bf16.mxu0 %v1641
    %1707 = vmatpush1.bf16.msra.mxu0 %v1640
    %1708 = vmatprep.subr.bf16.mxu0 %v1639
    %1709 = vmatpush1.bf16.msra.mxu0 %v1638
    %1710 = vmatprep.subr.bf16.mxu0 %v1637
    %1711 = vmatpush1.bf16.msra.mxu0 %v1636
    %1712 = vmatprep.subr.bf16.mxu0 %v1635
    %1713 = vmatpush1.bf16.msra.mxu0 %v1634
    %1714 = vmatprep.subr.bf16.mxu0 %v1665
    %1715 = vmatpush2.bf16.msra.mxu0 %v1664
    %1716 = vmatprep.subr.bf16.mxu0 %v1663
    %1717 = vmatpush2.bf16.msra.mxu0 %v1662
    %1718 = vmatprep.subr.bf16.mxu0 %v1661
    %1719 = vmatpush2.bf16.msra.mxu0 %v1660
    %1720 = vmatprep.subr.bf16.mxu0 %v1659
    %1721 = vmatpush2.bf16.msra.mxu0 %v1658
    %1722 = vmatprep.subr.bf16.mxu0 %v1657
    %1723 = vmatpush2.bf16.msra.mxu0 %v1656
    %1724 = vmatprep.subr.bf16.mxu0 %v1655
    %1725 = vmatpush2.bf16.msra.mxu0 %v1654
    %1726 = vmatprep.subr.bf16.mxu0 %v1653
    %1727 = vmatpush2.bf16.msra.mxu0 %v1652
    %1728 = vmatprep.subr.bf16.mxu0 %v1651
    %1729 = vmatpush2.bf16.msra.mxu0 %v1650
    %1730 = vmatprep.mubr.bf16.mxu0 %v1531
    %1731 = vmatmul.mubr.bf16.gmra.mxu0 %v1530
    %v1732 = vpop.f32.mrf.mxu0
    %v1733 = vadd.f32 %v1500, %v1732
    %v1734 = vpop.f32.mrf.mxu0
    %v1735 = vadd.f32 %v1502, %v1734
    %v1736 = vpop.f32.mrf.mxu0
    %v1737 = vadd.f32 %v1504, %v1736
    %v1738 = vpop.f32.mrf.mxu0
    %v1739 = vadd.f32 %v1506, %v1738
    %1740 = vmatprep.mubr.bf16.mxu0 %v1533
    %1741 = vmatmul.mubr.bf16.gmra.mxu0 %v1532
    %v1742 = vpop.f32.mrf.mxu0
    %v1743 = vadd.f32 %v1510, %v1742
    %v1744 = vpop.f32.mrf.mxu0
    %v1745 = vadd.f32 %v1512, %v1744
    %v1746 = vpop.f32.mrf.mxu0
    %v1747 = vadd.f32 %v1514, %v1746
    %v1748 = vpop.f32.mrf.mxu0
    %v1749 = vadd.f32 %v1516, %v1748
    %1750 = vdwg.mxu0
    %v1751 = vld [vmem:[#allocation3] sm:$0xee]
    %v1752 = vld [vmem:[#allocation3 + $0x18] sm:$0xee]
    %v1757 = vrot.slane %v1751, 5
    %v1758 = vrot.slane %v1757, 4
    %v1759 = vrot.slane %v1171, 5
    %v1760 = vsel %vm755, %v1758, %v1759
    %v1761 = vrot.slane %v1759, 4
    %v1762 = vrot.slane %v1206, 5
    %v1763 = vsel %vm755, %v1761, %v1762
    %v1764 = vrot.slane %v1752, 5
    %v1765 = vrot.slane %v1764, 4
    %v1766 = vrot.slane %v1173, 5
    %v1767 = vsel %vm755, %v1765, %v1766
    %v1768 = vrot.slane %v1766, 4
    %v1769 = vrot.slane %v1207, 5
    %v1770 = vsel %vm755, %v1768, %v1769
    %s1771 = scalar_lea.vmem [#allocation7], 512
    %v1772 = vld [vmem:[%s1771] sm:$0xff]
    %v1773 = vld [vmem:[%s1771 + $0x8] sm:$0xff]
    %v1774 = vld [vmem:[%s1771 + $0x10] sm:$0xff]
    %v1775 = vld [vmem:[%s1771 + $0x18] sm:$0xff]
    %v1776 = vld [vmem:[%s1771 + $0x20] sm:$0xff]
    %v1777 = vld [vmem:[%s1771 + $0x28] sm:$0xff]
    %v1778 = vld [vmem:[%s1771 + $0x30] sm:$0xff]
    %v1779 = vld [vmem:[%s1771 + $0x38] sm:$0xff]
    %v1780 = vld [vmem:[%s1771 + $0x40] sm:$0xff]
    %v1781 = vld [vmem:[%s1771 + $0x48] sm:$0xff]
    %v1782 = vld [vmem:[%s1771 + $0x50] sm:$0xff]
    %v1783 = vld [vmem:[%s1771 + $0x58] sm:$0xff]
    %v1784 = vld [vmem:[%s1771 + $0x60] sm:$0xff]
    %v1785 = vld [vmem:[%s1771 + $0x68] sm:$0xff]
    %v1786 = vld [vmem:[%s1771 + $0x70] sm:$0xff]
    %v1787 = vld [vmem:[%s1771 + $0x78] sm:$0xff]
    %v1788 = vld [vmem:[%s1771 + $0x80] sm:$0xff]
    %v1789 = vld [vmem:[%s1771 + $0x88] sm:$0xff]
    %v1790 = vld [vmem:[%s1771 + $0x90] sm:$0xff]
    %v1791 = vld [vmem:[%s1771 + $0x98] sm:$0xff]
    %v1792 = vld [vmem:[%s1771 + $0xa0] sm:$0xff]
    %v1793 = vld [vmem:[%s1771 + $0xa8] sm:$0xff]
    %v1794 = vld [vmem:[%s1771 + $0xb0] sm:$0xff]
    %v1795 = vld [vmem:[%s1771 + $0xb8] sm:$0xff]
    %v1796 = vld [vmem:[%s1771 + $0xc0] sm:$0xff]
    %v1797 = vld [vmem:[%s1771 + $0xc8] sm:$0xff]
    %v1798 = vld [vmem:[%s1771 + $0xd0] sm:$0xff]
    %v1799 = vld [vmem:[%s1771 + $0xd8] sm:$0xff]
    %v1800 = vld [vmem:[%s1771 + $0xe0] sm:$0xff]
    %v1801 = vld [vmem:[%s1771 + $0xe8] sm:$0xff]
    %v1802 = vld [vmem:[%s1771 + $0xf0] sm:$0xff]
    %v1803 = vld [vmem:[%s1771 + $0xf8] sm:$0xff]
    %v1804 = vunpack.c.l.b16 %v1760
    %v1805 = vunpack.c.h.b16 %v1760
    %v1806 = vunpack.c.l.b16 %v1763
    %v1807 = vunpack.c.h.b16 %v1763
    %v1808 = vunpack.c.l.b16 %v1767
    %v1809 = vunpack.c.h.b16 %v1767
    %v1810 = vunpack.c.l.b16 %v1770
    %v1811 = vunpack.c.h.b16 %v1770
    %v1812 = vpack.c.b16 %v1806, %v1804
    %v1813 = vpack.c.b16 %v1807, %v1805
    %v1814 = vpack.c.b16 %v1810, %v1808
    %v1815 = vpack.c.b16 %v1811, %v1809
    %v1852 = vunpack.c.l.b16 %v1772
    %v1853 = vunpack.c.h.b16 %v1772
    %v1854 = vunpack.c.l.b16 %v1773
    %v1855 = vunpack.c.h.b16 %v1773
    %v1856 = vunpack.c.l.b16 %v1774
    %v1857 = vunpack.c.h.b16 %v1774
    %v1858 = vunpack.c.l.b16 %v1775
    %v1859 = vunpack.c.h.b16 %v1775
    %v1860 = vunpack.c.l.b16 %v1776
    %v1861 = vunpack.c.h.b16 %v1776
    %v1862 = vunpack.c.l.b16 %v1777
    %v1863 = vunpack.c.h.b16 %v1777
    %v1864 = vunpack.c.l.b16 %v1778
    %v1865 = vunpack.c.h.b16 %v1778
    %v1866 = vunpack.c.l.b16 %v1779
    %v1867 = vunpack.c.h.b16 %v1779
    %v1868 = vunpack.c.l.b16 %v1780
    %v1869 = vunpack.c.h.b16 %v1780
    %v1870 = vunpack.c.l.b16 %v1781
    %v1871 = vunpack.c.h.b16 %v1781
    %v1872 = vunpack.c.l.b16 %v1782
    %v1873 = vunpack.c.h.b16 %v1782
    %v1874 = vunpack.c.l.b16 %v1783
    %v1875 = vunpack.c.h.b16 %v1783
    %v1876 = vunpack.c.l.b16 %v1784
    %v1877 = vunpack.c.h.b16 %v1784
    %v1878 = vunpack.c.l.b16 %v1785
    %v1879 = vunpack.c.h.b16 %v1785
    %v1880 = vunpack.c.l.b16 %v1786
    %v1881 = vunpack.c.h.b16 %v1786
    %v1882 = vunpack.c.l.b16 %v1787
    %v1883 = vunpack.c.h.b16 %v1787
    %v1884 = vunpack.c.l.b16 %v1788
    %v1885 = vunpack.c.h.b16 %v1788
    %v1886 = vunpack.c.l.b16 %v1789
    %v1887 = vunpack.c.h.b16 %v1789
    %v1888 = vunpack.c.l.b16 %v1790
    %v1889 = vunpack.c.h.b16 %v1790
    %v1890 = vunpack.c.l.b16 %v1791
    %v1891 = vunpack.c.h.b16 %v1791
    %v1892 = vunpack.c.l.b16 %v1792
    %v1893 = vunpack.c.h.b16 %v1792
    %v1894 = vunpack.c.l.b16 %v1793
    %v1895 = vunpack.c.h.b16 %v1793
    %v1896 = vunpack.c.l.b16 %v1794
    %v1897 = vunpack.c.h.b16 %v1794
    %v1898 = vunpack.c.l.b16 %v1795
    %v1899 = vunpack.c.h.b16 %v1795
    %v1900 = vunpack.c.l.b16 %v1796
    %v1901 = vunpack.c.h.b16 %v1796
    %v1902 = vunpack.c.l.b16 %v1797
    %v1903 = vunpack.c.h.b16 %v1797
    %v1904 = vunpack.c.l.b16 %v1798
    %v1905 = vunpack.c.h.b16 %v1798
    %v1906 = vunpack.c.l.b16 %v1799
    %v1907 = vunpack.c.h.b16 %v1799
    %v1908 = vunpack.c.l.b16 %v1800
    %v1909 = vunpack.c.h.b16 %v1800
    %v1910 = vunpack.c.l.b16 %v1801
    %v1911 = vunpack.c.h.b16 %v1801
    %v1912 = vunpack.c.l.b16 %v1802
    %v1913 = vunpack.c.h.b16 %v1802
    %v1914 = vunpack.c.l.b16 %v1803
    %v1915 = vunpack.c.h.b16 %v1803
    %v1916 = vpack.c.b16 %v1854, %v1852
    %v1917 = vpack.c.b16 %v1855, %v1853
    %v1918 = vpack.c.b16 %v1858, %v1856
    %v1919 = vpack.c.b16 %v1859, %v1857
    %v1920 = vpack.c.b16 %v1862, %v1860
    %v1921 = vpack.c.b16 %v1863, %v1861
    %v1922 = vpack.c.b16 %v1866, %v1864
    %v1923 = vpack.c.b16 %v1867, %v1865
    %v1924 = vpack.c.b16 %v1870, %v1868
    %v1925 = vpack.c.b16 %v1871, %v1869
    %v1926 = vpack.c.b16 %v1874, %v1872
    %v1927 = vpack.c.b16 %v1875, %v1873
    %v1928 = vpack.c.b16 %v1878, %v1876
    %v1929 = vpack.c.b16 %v1879, %v1877
    %v1930 = vpack.c.b16 %v1882, %v1880
    %v1931 = vpack.c.b16 %v1883, %v1881
    %v1932 = vpack.c.b16 %v1886, %v1884
    %v1933 = vpack.c.b16 %v1887, %v1885
    %v1934 = vpack.c.b16 %v1890, %v1888
    %v1935 = vpack.c.b16 %v1891, %v1889
    %v1936 = vpack.c.b16 %v1894, %v1892
    %v1937 = vpack.c.b16 %v1895, %v1893
    %v1938 = vpack.c.b16 %v1898, %v1896
    %v1939 = vpack.c.b16 %v1899, %v1897
    %v1940 = vpack.c.b16 %v1902, %v1900
    %v1941 = vpack.c.b16 %v1903, %v1901
    %v1942 = vpack.c.b16 %v1906, %v1904
    %v1943 = vpack.c.b16 %v1907, %v1905
    %v1944 = vpack.c.b16 %v1910, %v1908
    %v1945 = vpack.c.b16 %v1911, %v1909
    %v1946 = vpack.c.b16 %v1914, %v1912
    %v1947 = vpack.c.b16 %v1915, %v1913
    %1980 = vmatprep.subr.bf16.mxu0 %v1931
    %1981 = vmatpush1.bf16.msra.mxu0 %v1930
    %1982 = vmatprep.subr.bf16.mxu0 %v1929
    %1983 = vmatpush1.bf16.msra.mxu0 %v1928
    %1984 = vmatprep.subr.bf16.mxu0 %v1927
    %1985 = vmatpush1.bf16.msra.mxu0 %v1926
    %1986 = vmatprep.subr.bf16.mxu0 %v1925
    %1987 = vmatpush1.bf16.msra.mxu0 %v1924
    %1988 = vmatprep.subr.bf16.mxu0 %v1923
    %1989 = vmatpush1.bf16.msra.mxu0 %v1922
    %1990 = vmatprep.subr.bf16.mxu0 %v1921
    %1991 = vmatpush1.bf16.msra.mxu0 %v1920
    %1992 = vmatprep.subr.bf16.mxu0 %v1919
    %1993 = vmatpush1.bf16.msra.mxu0 %v1918
    %1994 = vmatprep.subr.bf16.mxu0 %v1917
    %1995 = vmatpush1.bf16.msra.mxu0 %v1916
    %1996 = vmatprep.subr.bf16.mxu0 %v1947
    %1997 = vmatpush2.bf16.msra.mxu0 %v1946
    %1998 = vmatprep.subr.bf16.mxu0 %v1945
    %1999 = vmatpush2.bf16.msra.mxu0 %v1944
    %2000 = vmatprep.subr.bf16.mxu0 %v1943
    %2001 = vmatpush2.bf16.msra.mxu0 %v1942
    %2002 = vmatprep.subr.bf16.mxu0 %v1941
    %2003 = vmatpush2.bf16.msra.mxu0 %v1940
    %2004 = vmatprep.subr.bf16.mxu0 %v1939
    %2005 = vmatpush2.bf16.msra.mxu0 %v1938
    %2006 = vmatprep.subr.bf16.mxu0 %v1937
    %2007 = vmatpush2.bf16.msra.mxu0 %v1936
    %2008 = vmatprep.subr.bf16.mxu0 %v1935
    %2009 = vmatpush2.bf16.msra.mxu0 %v1934
    %2010 = vmatprep.subr.bf16.mxu0 %v1933
    %2011 = vmatpush2.bf16.msra.mxu0 %v1932
    %2012 = vmatprep.mubr.bf16.mxu0 %v1813
    %2013 = vmatmul.mubr.bf16.gmra.mxu0 %v1812
    %v2014 = vpop.f32.mrf.mxu0
    %v2015 = vadd.f32 0.0, %v2014
    %v2016 = vpop.f32.mrf.mxu0
    %v2017 = vadd.f32 0.0, %v2016
    %v2018 = vpop.f32.mrf.mxu0
    %v2019 = vadd.f32 0.0, %v2018
    %v2020 = vpop.f32.mrf.mxu0
    %v2021 = vadd.f32 0.0, %v2020
    %2022 = vmatprep.mubr.bf16.mxu0 %v1815
    %2023 = vmatmul.mubr.bf16.gmra.mxu0 %v1814
    %v2024 = vpop.f32.mrf.mxu0
    %v2025 = vadd.f32 0.0, %v2024
    %v2026 = vpop.f32.mrf.mxu0
    %v2027 = vadd.f32 0.0, %v2026
    %v2028 = vpop.f32.mrf.mxu0
    %v2029 = vadd.f32 0.0, %v2028
    %v2030 = vpop.f32.mrf.mxu0
    %v2031 = vadd.f32 0.0, %v2030
    %2032 = vdwg.mxu0
    %v2033 = vadd.f32 %v1733, %v2015
    %v2034 = vadd.f32 %v1735, %v2017
    %v2035 = vadd.f32 %v1737, %v2019
    %v2036 = vadd.f32 %v1739, %v2021
    %v2037 = vadd.f32 %v1743, %v2025
    %v2038 = vadd.f32 %v1745, %v2027
    %v2039 = vadd.f32 %v1747, %v2029
    %v2040 = vadd.f32 %v1749, %v2031
    %v2041 = vld [vmem:[%s5] sm:$0x3]
    %v2043 = vlaneseq
    %v2044 = vshrl.u32 %v2043, 7
    %v2045 = vsub.s32 0, %v2044
    %v2046 = vrot.slane %v2041, %v2045
    %v2047 = vlaneseq
    %v2048 = vshrl.u32 %v2047, 7
    %v2049 = vsub.s32 1, %v2048
    %v2050 = vrot.slane %v2041, %v2049
    %v2053 = vmul.f32 %v2033, %v2046
    %v2054 = vmul.f32 %v2034, %v2050
    %v2055 = vmul.f32 %v2035, %v2046
    %v2056 = vmul.f32 %v2036, %v2050
    %v2057 = vmul.f32 %v2037, %v2046
    %v2058 = vmul.f32 %v2038, %v2050
    %v2059 = vmul.f32 %v2039, %v2046
    %v2060 = vmul.f32 %v2040, %v2050
    %v2061 = vld [vmem:[%s6] sm:$0x3]
    %v2063 = vlaneseq
    %v2064 = vshrl.u32 %v2063, 7
    %v2065 = vsub.s32 0, %v2064
    %v2066 = vrot.slane %v2061, %v2065
    %v2067 = vlaneseq
    %v2068 = vshrl.u32 %v2067, 7
    %v2069 = vsub.s32 1, %v2068
    %v2070 = vrot.slane %v2061, %v2069
    %v2073 = vadd.f32 %v2053, %v2066
    %v2074 = vadd.f32 %v2054, %v2070
    %v2075 = vadd.f32 %v2055, %v2066
    %v2076 = vadd.f32 %v2056, %v2070
    %v2077 = vadd.f32 %v2057, %v2066
    %v2078 = vadd.f32 %v2058, %v2070
    %v2079 = vadd.f32 %v2059, %v2066
    %v2080 = vadd.f32 %v2060, %v2070
    %v2081 = vadd.f32 %v2073, %v2075
    %v2082 = vrot.slane %v2081, 4
    %v2083 = vadd.f32 %v2081, %v2082
    %v2084 = vrot.slane %v2083, 2
    %v2085 = vadd.f32 %v2083, %v2084
    %v2086 = vrot.slane %v2085, 1
    %v2087 = vadd.f32 %v2085, %v2086
    %v2088 = vadd.f32 %v2074, %v2076
    %v2089 = vrot.slane %v2088, 4
    %v2090 = vadd.f32 %v2088, %v2089
    %v2091 = vrot.slane %v2090, 2
    %v2092 = vadd.f32 %v2090, %v2091
    %v2093 = vrot.slane %v2092, 1
    %v2094 = vadd.f32 %v2092, %v2093
    %v2095 = vadd.f32 %v2077, %v2079
    %v2096 = vrot.slane %v2095, 4
    %v2097 = vadd.f32 %v2095, %v2096
    %v2098 = vrot.slane %v2097, 2
    %v2099 = vadd.f32 %v2097, %v2098
    %v2100 = vrot.slane %v2099, 1
    %v2101 = vadd.f32 %v2099, %v2100
    %v2102 = vadd.f32 %v2078, %v2080
    %v2103 = vrot.slane %v2102, 4
    %v2104 = vadd.f32 %v2102, %v2103
    %v2105 = vrot.slane %v2104, 2
    %v2106 = vadd.f32 %v2104, %v2105
    %v2107 = vrot.slane %v2106, 1
    %v2108 = vadd.f32 %v2106, %v2107
    %v2109 = vld [vmem:[%s7] sm:$0xff]
    %v2110 = vld [vmem:[%s7 + $0x8] sm:$0xff]
    %v2111 = vld [vmem:[%s7 + $0x10] sm:$0xff]
    %v2112 = vld [vmem:[%s7 + $0x18] sm:$0xff]
    %v2113 = vld [vmem:[%s7 + $0x20] sm:$0xff]
    %v2114 = vld [vmem:[%s7 + $0x28] sm:$0xff]
    %v2115 = vld [vmem:[%s7 + $0x30] sm:$0xff]
    %v2116 = vld [vmem:[%s7 + $0x38] sm:$0xff]
    %v2117 = vld [vmem:[%s7 + $0x40] sm:$0xff]
    %v2118 = vld [vmem:[%s7 + $0x48] sm:$0xff]
    %v2119 = vld [vmem:[%s7 + $0x50] sm:$0xff]
    %v2120 = vld [vmem:[%s7 + $0x58] sm:$0xff]
    %v2121 = vld [vmem:[%s7 + $0x60] sm:$0xff]
    %v2122 = vld [vmem:[%s7 + $0x68] sm:$0xff]
    %v2123 = vld [vmem:[%s7 + $0x70] sm:$0xff]
    %v2124 = vld [vmem:[%s7 + $0x78] sm:$0xff]
    %v2125 = vld [vmem:[%s7 + $0x80] sm:$0xff]
    %v2126 = vld [vmem:[%s7 + $0x88] sm:$0xff]
    %v2127 = vld [vmem:[%s7 + $0x90] sm:$0xff]
    %v2128 = vld [vmem:[%s7 + $0x98] sm:$0xff]
    %v2129 = vld [vmem:[%s7 + $0xa0] sm:$0xff]
    %v2130 = vld [vmem:[%s7 + $0xa8] sm:$0xff]
    %v2131 = vld [vmem:[%s7 + $0xb0] sm:$0xff]
    %v2132 = vld [vmem:[%s7 + $0xb8] sm:$0xff]
    %v2133 = vld [vmem:[%s7 + $0xc0] sm:$0xff]
    %v2134 = vld [vmem:[%s7 + $0xc8] sm:$0xff]
    %v2135 = vld [vmem:[%s7 + $0xd0] sm:$0xff]
    %v2136 = vld [vmem:[%s7 + $0xd8] sm:$0xff]
    %v2137 = vld [vmem:[%s7 + $0xe0] sm:$0xff]
    %v2138 = vld [vmem:[%s7 + $0xe8] sm:$0xff]
    %v2139 = vld [vmem:[%s7 + $0xf0] sm:$0xff]
    %v2140 = vld [vmem:[%s7 + $0xf8] sm:$0xff]
    %vm2145 = vcmask 1041409
    %v2146 = vsel %vm2145, %v2101, %v2087
    %v2147 = vsel %vm2145, %v2108, %v2094
    %2150 = vmatprep.subr.mxu0 0.0
    %2151 = vmatpush1.msra.mxu0 %v2124
    %2152 = vmatprep.subr.mxu0 0.0
    %2153 = vmatpush1.msra.mxu0 %v2123
    %2154 = vmatprep.subr.mxu0 0.0
    %2155 = vmatpush1.msra.mxu0 %v2122
    %2156 = vmatprep.subr.mxu0 0.0
    %2157 = vmatpush1.msra.mxu0 %v2121
    %2158 = vmatprep.subr.mxu0 0.0
    %2159 = vmatpush1.msra.mxu0 %v2120
    %2160 = vmatprep.subr.mxu0 0.0
    %2161 = vmatpush1.msra.mxu0 %v2119
    %2162 = vmatprep.subr.mxu0 0.0
    %2163 = vmatpush1.msra.mxu0 %v2118
    %2164 = vmatprep.subr.mxu0 0.0
    %2165 = vmatpush1.msra.mxu0 %v2117
    %2166 = vmatprep.subr.mxu0 0.0
    %2167 = vmatpush1.msra.mxu0 %v2116
    %2168 = vmatprep.subr.mxu0 0.0
    %2169 = vmatpush1.msra.mxu0 %v2115
    %2170 = vmatprep.subr.mxu0 0.0
    %2171 = vmatpush1.msra.mxu0 %v2114
    %2172 = vmatprep.subr.mxu0 0.0
    %2173 = vmatpush1.msra.mxu0 %v2113
    %2174 = vmatprep.subr.mxu0 0.0
    %2175 = vmatpush1.msra.mxu0 %v2112
    %2176 = vmatprep.subr.mxu0 0.0
    %2177 = vmatpush1.msra.mxu0 %v2111
    %2178 = vmatprep.subr.mxu0 0.0
    %2179 = vmatpush1.msra.mxu0 %v2110
    %2180 = vmatprep.subr.mxu0 0.0
    %2181 = vmatpush1.msra.mxu0 %v2109
    %2182 = vmatprep.subr.mxu0 0.0
    %2183 = vmatpush2.msra.mxu0 %v2140
    %2184 = vmatprep.subr.mxu0 0.0
    %2185 = vmatpush2.msra.mxu0 %v2139
    %2186 = vmatprep.subr.mxu0 0.0
    %2187 = vmatpush2.msra.mxu0 %v2138
    %2188 = vmatprep.subr.mxu0 0.0
    %2189 = vmatpush2.msra.mxu0 %v2137
    %2190 = vmatprep.subr.mxu0 0.0
    %2191 = vmatpush2.msra.mxu0 %v2136
    %2192 = vmatprep.subr.mxu0 0.0
    %2193 = vmatpush2.msra.mxu0 %v2135
    %2194 = vmatprep.subr.mxu0 0.0
    %2195 = vmatpush2.msra.mxu0 %v2134
    %2196 = vmatprep.subr.mxu0 0.0
    %2197 = vmatpush2.msra.mxu0 %v2133
    %2198 = vmatprep.subr.mxu0 0.0
    %2199 = vmatpush2.msra.mxu0 %v2132
    %2200 = vmatprep.subr.mxu0 0.0
    %2201 = vmatpush2.msra.mxu0 %v2131
    %2202 = vmatprep.subr.mxu0 0.0
    %2203 = vmatpush2.msra.mxu0 %v2130
    %2204 = vmatprep.subr.mxu0 0.0
    %2205 = vmatpush2.msra.mxu0 %v2129
    %2206 = vmatprep.subr.mxu0 0.0
    %2207 = vmatpush2.msra.mxu0 %v2128
    %2208 = vmatprep.subr.mxu0 0.0
    %2209 = vmatpush2.msra.mxu0 %v2127
    %2210 = vmatprep.subr.mxu0 0.0
    %2211 = vmatpush2.msra.mxu0 %v2126
    %2212 = vmatprep.subr.mxu0 0.0
    %2213 = vmatpush2.msra.mxu0 %v2125
    %2214 = vmatprep.mubr.f32.mxu0 %v2147
    %2215 = vmatmul.mubr.f32.gmra.mxu0 %v2146
    %v2216 = vpop.f32.mrf.mxu0
    %v2217 = vadd.f32 0.0, %v2216
    %v2218 = vpop.f32.mrf.mxu0
    %2219 = vdwg.mxu0
    %v2220 = vmax.f32 %v2217, 0.0
    %v2221 = vmin.f32 %v2220, 6.0
    %v2222 = vld [vmem:[%s8] sm:$0xf]
    %vm2223 = vcmask 31744
    %v2225 = vsel %vm2223, %v2221, 0
    %vm2227 = vcmask 1043456
    %v2229 = vsel %vm2227, %v2222, 0
    %2231 = vmatprep.subr.mxu0 0.0
    %2232 = vmatpush1.msra.mxu0 0.0
    %2233 = vmatprep.subr.mxu0 0.0
    %2234 = vmatpush1.msra.mxu0 0.0
    %2235 = vmatprep.subr.mxu0 0.0
    %2236 = vmatpush1.msra.mxu0 0.0
    %2237 = vmatprep.subr.mxu0 0.0
    %2238 = vmatpush1.msra.mxu0 0.0
    %2239 = vmatprep.subr.mxu0 0.0
    %2240 = vmatpush1.msra.mxu0 0.0
    %2241 = vmatprep.subr.mxu0 0.0
    %2242 = vmatpush1.msra.mxu0 0.0
    %2243 = vmatprep.subr.mxu0 0.0
    %2244 = vmatpush1.msra.mxu0 0.0
    %2245 = vmatprep.subr.mxu0 0.0
    %2246 = vmatpush1.msra.mxu0 0.0
    %2247 = vmatprep.subr.mxu0 0.0
    %2248 = vmatpush1.msra.mxu0 0.0
    %2249 = vmatprep.subr.mxu0 0.0
    %2250 = vmatpush1.msra.mxu0 0.0
    %2251 = vmatprep.subr.mxu0 0.0
    %2252 = vmatpush1.msra.mxu0 0.0
    %2253 = vmatprep.subr.mxu0 0.0
    %2254 = vmatpush1.msra.mxu0 0.0
    %2255 = vmatprep.subr.mxu0 0.0
    %2256 = vmatpush1.msra.mxu0 0.0
    %2257 = vmatprep.subr.mxu0 0.0
    %2258 = vmatpush1.msra.mxu0 0.0
    %2259 = vmatprep.subr.mxu0 0.0
    %2260 = vmatpush1.msra.mxu0 0.0
    %2261 = vmatprep.subr.mxu0 0.0
    %2262 = vmatpush1.msra.mxu0 %v2229
    %2263 = vmatprep.subr.mxu0 0.0
    %2264 = vmatpush2.msra.mxu0 0.0
    %2265 = vmatprep.subr.mxu0 0.0
    %2266 = vmatpush2.msra.mxu0 0.0
    %2267 = vmatprep.subr.mxu0 0.0
    %2268 = vmatpush2.msra.mxu0 0.0
    %2269 = vmatprep.subr.mxu0 0.0
    %2270 = vmatpush2.msra.mxu0 0.0
    %2271 = vmatprep.subr.mxu0 0.0
    %2272 = vmatpush2.msra.mxu0 0.0
    %2273 = vmatprep.subr.mxu0 0.0
    %2274 = vmatpush2.msra.mxu0 0.0
    %2275 = vmatprep.subr.mxu0 0.0
    %2276 = vmatpush2.msra.mxu0 0.0
    %2277 = vmatprep.subr.mxu0 0.0
    %2278 = vmatpush2.msra.mxu0 0.0
    %2279 = vmatprep.subr.mxu0 0.0
    %2280 = vmatpush2.msra.mxu0 0.0
    %2281 = vmatprep.subr.mxu0 0.0
    %2282 = vmatpush2.msra.mxu0 0.0
    %2283 = vmatprep.subr.mxu0 0.0
    %2284 = vmatpush2.msra.mxu0 0.0
    %2285 = vmatprep.subr.mxu0 0.0
    %2286 = vmatpush2.msra.mxu0 0.0
    %2287 = vmatprep.subr.mxu0 0.0
    %2288 = vmatpush2.msra.mxu0 0.0
    %2289 = vmatprep.subr.mxu0 0.0
    %2290 = vmatpush2.msra.mxu0 0.0
    %2291 = vmatprep.subr.mxu0 0.0
    %2292 = vmatpush2.msra.mxu0 0.0
    %2293 = vmatprep.subr.mxu0 0.0
    %2294 = vmatpush2.msra.mxu0 0.0
    %2295 = vmatprep.mubr.f32.mxu0 0.0
    %2296 = vmatmul.mubr.f32.gmra.mxu0 %v2225
    %v2297 = vpop.f32.mrf.mxu0
    %v2298 = vadd.f32 0.0, %v2297
    %v2299 = vpop.f32.mrf.mxu0
    %2300 = vdwg.mxu0
    %v2301 = vxor.u32 %v2298, 2147483648
    %v2302 = vmul.f32 %v2301, 1.442695
    %v2303 = vpow.pop %v2302
    %v2304 = vadd.f32 %v2303, 1.0
    %v2305 = vrcp.pop %v2304
    %v2306 = vmul.f32 1.0, %v2305
    %2308 = vrot.lane.b32.xlu0 %v2306, 16
    %v2309 = vpop.permute.xlu0 %2308
    %2311 = vrot.lane.b32.xlu0 %v2306, 32
    %v2312 = vpop.permute.xlu0 %2311
    %2314 = vrot.lane.b32.xlu0 %v2306, 48
    %v2315 = vpop.permute.xlu0 %2314
    %2317 = vrot.lane.b32.xlu0 %v2306, 64
    %v2318 = vpop.permute.xlu0 %2317
    %2320 = vrot.lane.b32.xlu0 %v2306, 80
    %v2321 = vpop.permute.xlu0 %2320
    %2323 = vrot.lane.b32.xlu0 %v2306, 96
    %v2324 = vpop.permute.xlu0 %2323
    %2326 = vrot.lane.b32.xlu0 %v2306, 112
    %v2327 = vpop.permute.xlu0 %2326
    %vm2329 = vcmask 130048
    %v2330 = vsel %vm2329, %v2306, %v2309
    %vm2331 = vcmask 261120
    %v2332 = vsel %vm2331, %v2330, %v2312
    %vm2333 = vcmask 392192
    %v2334 = vsel %vm2333, %v2332, %v2315
    %vm2335 = vcmask 523264
    %v2336 = vsel %vm2335, %v2334, %v2318
    %vm2337 = vcmask 654336
    %v2338 = vsel %vm2337, %v2336, %v2321
    %vm2339 = vcmask 785408
    %v2340 = vsel %vm2339, %v2338, %v2324
    %vm2341 = vcmask 916480
    %v2342 = vsel %vm2341, %v2340, %v2327
    %v2344 = vcombine.low %v2342, %v2342
    %v2346 = vunpack.c.l.s4 1966171168
    %v2347 = vunpack.c.0.s8 %v2346
    %v2348 = vlaneseq
    %v2349 = vshrl.u32 %v2348, 7
    %v2350 = vsub.s32 %v2347, %v2349
    %v2351 = vrot.slane %v2344, %v2350
    %v2352 = vcombine.high %v2351, %v2351
    %v2354 = vunpack.c.l.s4 1966171168
    %v2355 = vunpack.c.0.s8 %v2354
    %v2356 = vlaneseq
    %v2357 = vshrl.u32 %v2356, 7
    %v2358 = vsub.s32 %v2355, %v2357
    %v2359 = vrot.slane %v2351, %v2358
    %v2361 = vunpack.c.l.s4 1966171168
    %v2362 = vunpack.c.0.s8 %v2361
    %v2363 = vlaneseq
    %v2364 = vshrl.u32 %v2363, 7
    %v2365 = vsub.s32 %v2362, %v2364
    %v2366 = vrot.slane %v2352, %v2365
    %v2367 = vlaneseq
    %v2368 = vshrl.u32 %v2367, 7
    %v2369 = vsub.s32 0, %v2368
    %v2370 = vrot.slane %v2359, %v2369
    %v2371 = vlaneseq
    %v2372 = vshrl.u32 %v2371, 7
    %v2373 = vsub.s32 1, %v2372
    %v2374 = vrot.slane %v2359, %v2373
    %v2375 = vlaneseq
    %v2376 = vshrl.u32 %v2375, 7
    %v2377 = vsub.s32 0, %v2376
    %v2378 = vrot.slane %v2366, %v2377
    %v2379 = vlaneseq
    %v2380 = vshrl.u32 %v2379, 7
    %v2381 = vsub.s32 1, %v2380
    %v2382 = vrot.slane %v2366, %v2381
    %v2387 = vmul.f32 %v2073, %v2370
    %v2388 = vmul.f32 %v2074, %v2374
    %v2389 = vmul.f32 %v2075, %v2370
    %v2390 = vmul.f32 %v2076, %v2374
    %v2391 = vmul.f32 %v2077, %v2378
    %v2392 = vmul.f32 %v2078, %v2382
    %v2393 = vmul.f32 %v2079, %v2378
    %v2394 = vmul.f32 %v2080, %v2382
    %v2395 = vunpack.c.l.bf16 %v98
    %v2396 = vunpack.c.h.bf16 %v98
    %v2397 = vunpack.c.l.bf16 %v99
    %v2398 = vunpack.c.h.bf16 %v99
    %v2399 = vunpack.c.l.bf16 %v100
    %v2400 = vunpack.c.h.bf16 %v100
    %v2401 = vunpack.c.l.bf16 %v101
    %v2402 = vunpack.c.h.bf16 %v101
    %v2403 = vadd.f32 %v2387, %v2395
    %v2404 = vadd.f32 %v2388, %v2396
    %v2405 = vadd.f32 %v2389, %v2397
    %v2406 = vadd.f32 %v2390, %v2398
    %v2407 = vadd.f32 %v2391, %v2399
    %v2408 = vadd.f32 %v2392, %v2400
    %v2409 = vadd.f32 %v2393, %v2401
    %v2410 = vadd.f32 %v2394, %v2402
    %v2411 = vmax.f32 %v2403, 0.0
    %v2412 = vmax.f32 %v2404, 0.0
    %v2413 = vmax.f32 %v2405, 0.0
    %v2414 = vmax.f32 %v2406, 0.0
    %v2415 = vmax.f32 %v2407, 0.0
    %v2416 = vmax.f32 %v2408, 0.0
    %v2417 = vmax.f32 %v2409, 0.0
    %v2418 = vmax.f32 %v2410, 0.0
    %v2419 = vmin.f32 %v2411, 6.0
    %v2420 = vmin.f32 %v2412, 6.0
    %v2421 = vmin.f32 %v2413, 6.0
    %v2422 = vmin.f32 %v2414, 6.0
    %v2423 = vmin.f32 %v2415, 6.0
    %v2424 = vmin.f32 %v2416, 6.0
    %v2425 = vmin.f32 %v2417, 6.0
    %v2426 = vmin.f32 %v2418, 6.0
    %2427 = vst [vmem:[#allocation9] sm:$0xff] %v2419
    %2428 = vst [vmem:[#allocation9 + $0x8] sm:$0xff] %v2420
    %2429 = vst [vmem:[#allocation9 + $0x10] sm:$0xff] %v2421
    %2430 = vst [vmem:[#allocation9 + $0x18] sm:$0xff] %v2422
    %2431 = vst [vmem:[#allocation9 + $0x20] sm:$0xff] %v2423
    %2432 = vst [vmem:[#allocation9 + $0x28] sm:$0xff] %v2424
    %2433 = vst [vmem:[#allocation9 + $0x30] sm:$0xff] %v2425
    %2434 = vst [vmem:[#allocation9 + $0x38] sm:$0xff] %v2426
    // Predicated region
    $region46: #{tpu_custom_call.1} parent=1 // pred_check
      _
    $region47: #{tpu_custom_call.1} parent=1 // pred_check_branch
      %2436 = sbr.rel (0) target = $region49
    $region48: #{tpu_custom_call.1} parent=1 // pred_region
      %s2438 = ssub.s32 1024, 1024
      %2439 = vsyncadd [#allocation6], %s2438
      %s2440 = sshll.u32 [#allocation9], 4
      %s2441 = int_to_ptr.vmem [resolvable:$true] %s2440
      %2446 = dma.vmem_to_hbm [thread:$0]  %s2441, 1024, %s9, [#allocation6], 256, 256, 16
    $region49: #{tpu_custom_call.1} parent=1 // pred_fallthru
      _
    // Predicated region
    $region50: #{tpu_custom_call.1} parent=1 // pred_check
      _
    $region51: #{tpu_custom_call.1} parent=1 // pred_check_branch
      %2448 = sbr.rel (0) target = $region53
    $region52: #{tpu_custom_call.1} parent=1 // pred_region
      %2449 = dma.done [#allocation6], 1024
    $region53: #{tpu_custom_call.1} parent=1 // pred_fallthru
      _
    %2450 = vsyncpa [#allocation5], 1
    %2451 = vsyncpa [#allocation8], 1
    %2452 = vsyncpa [#allocation6], 1

</llo_original>
